<compile_context>
chip_gen: v7x
topology: tpu7x:2x2x1
jax: 0.10.0
libtpu: 0.0.40
codegen_flags: <defaults>
</compile_context>

<pallas_src>
import jax
import jax.numpy as jnp
import numpy as np
from jax import lax
from jax.experimental import pallas as pl
from jax.experimental.pallas import tpu as pltpu  # noqa: F401  (TPU backend)

# ---- problem sizes (small, consistent with the module) ----
N_HEAD = 2
D_HEAD = 8
D_MODEL = 32
D_INNER = 64
QLEN = 8
BSZ = 2
KLEN = QLEN                       # no mems -> klen == qlen
HD = N_HEAD * D_HEAD              # 16
PW = N_HEAD * 2 * KLEN            # per-batch score-panel width (AC|B_ per head) = 32
W64 = BSZ * PW                    # 64
SCALE = 1.0 / (D_HEAD ** 0.5)
LN_EPS = 1e-5
OUT_LANES = 128                   # lane-dense output slab


# ---------------------------------------------------------------------------
# Single fused kernel.
# Score panel layout (per batch b, columns):
#   [ AC_h0 (K) | B_h0 (K) | AC_h1 (K) | B_h1 (K) ]   -> 32 cols, batches side
# by side -> 64 cols.  The Transformer-XL rel_shift
#   BD[i, j] = Bpre[i, j+K-1-i]   (j <= i)
#            = 0                  (j == i+1)
#            = Bpre[i+1, j-i-2]   (j >= i+2)
# is realised as two per-row-variable LEFT shifts of the (AC|B_) panels
# (the B_ columns sit right of the AC columns, so "shift by K + (K-1-i)" /
# "shift by K-2-i" lands the shifted B_ values on the AC column positions),
# implemented with a 3-stage shift/select (butterfly) network.
# ---------------------------------------------------------------------------
def _decoder_layer_kernel(x_ref, wqkv_ref, rwb_ref, remb0_ref, remb1_ref,
                          rbias_row_ref, wo_ref, g1_ref, b1_ref,
                          wf1_ref, bf1_ref, wf2_ref, bf2_ref,
                          g2_ref, b2_ref, out_ref):
    f32 = jnp.float32
    x2d = x_ref[...]                                            # (Q, B*Dm) = (8, 64)
    # stack batches along rows -> (B*Q, Dm) = (16, 32)
    w_all = jnp.concatenate([x2d[:, :D_MODEL], x2d[:, D_MODEL:]], axis=0)

    # ---- fused QKV projection: one MXU push for all tokens ----
    qkv = jnp.dot(w_all, wqkv_ref[...], preferred_element_type=f32)   # (16, 48)

    rwb = rwb_ref[...]                                          # (1, HD)
    remb0 = remb0_ref[...]                                      # (K, HD), head0 cols
    remb1 = remb1_ref[...]                                      # (K, HD), head1 cols
    rbias_row = rbias_row_ref[...]                              # (1, 64)

    # trace-time iota masks (VPU selects; no relayout-heavy slicing)
    lane16 = lax.broadcasted_iota(jnp.int32, (1, HD), 1)
    h0_cols = lane16 < D_HEAD
    h1_cols = lane16 >= D_HEAD
    lane64 = lax.broadcasted_iota(jnp.int32, (1, W64), 1)
    jloc = lane64 & (2 * KLEN - 1)          # column within its 16-wide (AC|B_) panel
    is_ac = jloc < KLEN
    row_q = lax.broadcasted_iota(jnp.int32, (QLEN, 1), 0)

    q_all = qkv[:, :HD]                                         # (16, 16) both batches
    k0 = qkv[:QLEN, HD:2 * HD]
    k1 = qkv[QLEN:, HD:2 * HD]
    v0 = qkv[:QLEN, 2 * HD:]
    v1 = qkv[QLEN:, 2 * HD:]

    # ---- ONE MXU push for all (batch, head) score blocks ----
    #   lhs = [q_batch0 ; q_batch1 ; r_w_bias]             (2Q+1, HD)
    #   rhs = per (b,h): [k_b masked to head h ; r_emb_h]  (B*H*2K, HD)
    # contraction over HD; head masking keeps the blocks independent.
    lhs = jnp.concatenate([q_all, rwb], axis=0)                 # (17, 16)
    rhs = jnp.concatenate([
        jnp.where(h0_cols, k0, 0.0), remb0, jnp.where(h1_cols, k0, 0.0), remb1,
        jnp.where(h0_cols, k1, 0.0), remb0, jnp.where(h1_cols, k1, 0.0), remb1,
    ], axis=0)                                                  # (64, 16)
    raw_sc = lax.dot_general(lhs, rhs, (((1,), (1,)), ((), ())),
                             preferred_element_type=f32)        # (17, 64)

    # per-batch panels, queries i=0..Q-1 and the "next query row" version
    sc_q = jnp.concatenate([raw_sc[0:QLEN, 0:PW],
                            raw_sc[QLEN:2 * QLEN, PW:2 * PW]], axis=1)        # (8, 64)
    sc_up = jnp.concatenate([raw_sc[1:QLEN + 1, 0:PW],
                             raw_sc[QLEN + 1:2 * QLEN + 1, PW:2 * PW]], axis=1)
    rwb_k = raw_sc[2 * QLEN:2 * QLEN + 1, :]                    # (1, 64) r_w_bias·k row

    # AC cols: q·k + r_w_bias·k ;  B_ cols: q·r_emb + r_bias
    adj = sc_q + jnp.where(is_ac, rwb_k, 0.0) + rbias_row       # (8, 64)
    adj_up = sc_up + rbias_row                                  # rows shifted up by 1

    # ---- vectorised rel_shift (shift/select network, all panels at once) ----
    def lshift(x, s):
        return jnp.concatenate([x[:, s:], jnp.zeros((QLEN, s), f32)], axis=1)

    amt_low = (KLEN - 1) - row_q            # 7 - i  (extra shift beyond K)
    amt_up = (KLEN - 2) - row_q             # 6 - i  (row 7 unused, masked below)
    t_low = lshift(adj, KLEN)               # unconditional shift by K
    t_up = adj_up
    for s in (4, 2, 1):
        t_low = jnp.where((amt_low & s) != 0, lshift(t_low, s), t_low)
        t_up = jnp.where((amt_up & s) != 0, lshift(t_up, s), t_up)

    tri_low = (jloc <= row_q) & is_ac       # j <= i
    tri_up = (jloc >= row_q + 2) & is_ac    # j >= i+2
    zero64 = jnp.zeros_like(adj)
    scores = (adj + jnp.where(tri_low, t_low, zero64)
                  + jnp.where(tri_up, t_up, zero64)) * SCALE    # valid at AC cols

    # ---- softmax per (batch, head) block, exact division ----
    p_panels = []
    for b in range(BSZ):
        base = b * PW
        heads = []
        for h in range(N_HEAD):
            s_bh = scores[:, base + h * 2 * KLEN: base + h * 2 * KLEN + KLEN]  # (8, 8)
            m = jnp.max(s_bh, axis=-1, keepdims=True)
            e = jnp.exp(s_bh - m)
            heads.append(e / jnp.sum(e, axis=-1, keepdims=True))
        p_panels.append(jnp.concatenate(heads, axis=1))         # (8, 16)

    # ---- ONE MXU push for all P @ V (block-diagonal over batch & head) ----
    zqh = jnp.zeros((QLEN, HD), f32)
    p_blockdiag = jnp.concatenate(
        [jnp.concatenate([p_panels[0], zqh], axis=1),
         jnp.concatenate([zqh, p_panels[1]], axis=1)], axis=0)  # (16, 32)
    v_blockdiag = jnp.concatenate(
        [jnp.where(h0_cols, v0, 0.0), jnp.where(h1_cols, v0, 0.0),
         jnp.where(h0_cols, v1, 0.0), jnp.where(h1_cols, v1, 0.0)], axis=0)  # (32, 16)
    attn_vec = jnp.dot(p_blockdiag, v_blockdiag,
                       preferred_element_type=f32)              # (16, 16)

    # ---- output projection, residual + LayerNorm 1 (post-lnorm) ----
    attn_out = jnp.dot(attn_vec, wo_ref[...], preferred_element_type=f32)   # (16, 32)
    x1 = w_all + attn_out
    mu1 = jnp.mean(x1, axis=-1, keepdims=True)
    var1 = jnp.mean((x1 - mu1) ** 2, axis=-1, keepdims=True)
    y1 = (x1 - mu1) * lax.rsqrt(var1 + LN_EPS) * g1_ref[...] + b1_ref[...]

    # ---- PositionwiseFF: Linear -> ReLU -> Linear, residual + LayerNorm 2 ----
    h1 = jnp.maximum(
        jnp.dot(y1, wf1_ref[...], preferred_element_type=f32) + bf1_ref[...], 0.0)
    h2 = jnp.dot(h1, wf2_ref[...], preferred_element_type=f32) + bf2_ref[...]
    x2 = y1 + h2
    mu2 = jnp.mean(x2, axis=-1, keepdims=True)
    var2 = jnp.mean((x2 - mu2) ** 2, axis=-1, keepdims=True)
    y2 = (x2 - mu2) * lax.rsqrt(var2 + LN_EPS) * g2_ref[...] + b2_ref[...]   # (16, 32)

    # lane-dense (8, 128) store: [batch0 | batch1 | zero pad]
    pad = jnp.zeros((QLEN, OUT_LANES - BSZ * D_MODEL), f32)
    out_ref[...] = jnp.concatenate([y2[:QLEN, :], y2[QLEN:, :], pad], axis=1)


# ---------------------------------------------------------------------------
# Wrapper: single pallas_call, everything resident in VMEM (KB-scale problem).
# ---------------------------------------------------------------------------
def rel_learnable_decoder_layer(dec_inp, params):
    Q, B, Dm = dec_inp.shape
    assert (Q, B, Dm) == (QLEN, BSZ, D_MODEL)
    x2d = dec_inp.reshape(Q, B * Dm).astype(jnp.float32)        # free reshape, no transpose

    out = pl.pallas_call(
        _decoder_layer_kernel,
        out_shape=jax.ShapeDtypeStruct((Q, OUT_LANES), jnp.float32),
    )(x2d, params["W_qkv_T"], params["rwb_row"], params["remb0"], params["remb1"],
      params["rbias_row"], params["W_o_T"], params["ln1_g"], params["ln1_b"],
      params["W_ff1_T"], params["b_ff1"], params["W_ff2_T"], params["b_ff2"],
      params["ln2_g"], params["ln2_b"])

    return out[:, :B * Dm].reshape(Q, B, Dm)                    # (qlen, bsz, d_model)


# ---------------------------------------------------------------------------
# One-time (per layer) parameter packing: transposes, f32 casts and the
# relative-position tensors laid out to match the kernel's column blocks.
# Done OUTSIDE the jitted forward (review: keep the hot path = one pallas_call).
# ---------------------------------------------------------------------------
def prepare_params(raw, r_emb, r_w_bias, r_bias):
    f32 = np.float32
    remb = np.asarray(r_emb, f32)                 # (K, H, Dh)
    rbias = np.asarray(r_bias, f32)               # (K, H)

    remb0 = np.zeros((KLEN, HD), f32)
    remb0[:, :D_HEAD] = remb[:, 0, :]
    remb1 = np.zeros((KLEN, HD), f32)
    remb1[:, D_HEAD:] = remb[:, 1, :]

    rbias_row = np.zeros((1, W64), f32)
    for b in range(BSZ):
        for h in range(N_HEAD):
            base = (b * N_HEAD + h) * 2 * KLEN
            rbias_row[0, base + KLEN: base + 2 * KLEN] = rbias[:, h]

    def a(x):
        return jnp.asarray(np.asarray(x, f32))

    return {
        "W_qkv_T": a(np.asarray(raw["W_qkv"], f32).T),            # (Dm, 3*HD)
        "W_o_T":   a(np.asarray(raw["W_o"], f32).T),              # (HD, Dm)
        "ln1_g":   a(np.asarray(raw["ln1_g"], f32).reshape(1, D_MODEL)),
        "ln1_b":   a(np.asarray(raw["ln1_b"], f32).reshape(1, D_MODEL)),
        "W_ff1_T": a(np.asarray(raw["W_ff1"], f32).T),            # (Dm, Di)
        "b_ff1":   a(np.asarray(raw["b_ff1"], f32).reshape(1, D_INNER)),
        "W_ff2_T": a(np.asarray(raw["W_ff2"], f32).T),            # (Di, Dm)
        "b_ff2":   a(np.asarray(raw["b_ff2"], f32).reshape(1, D_MODEL)),
        "ln2_g":   a(np.asarray(raw["ln2_g"], f32).reshape(1, D_MODEL)),
        "ln2_b":   a(np.asarray(raw["ln2_b"], f32).reshape(1, D_MODEL)),
        "rwb_row": a(np.asarray(r_w_bias, f32).reshape(1, HD)),
        "remb0":   a(remb0),
        "remb1":   a(remb1),
        "rbias_row": a(rbias_row),
    }


# ---------------------------------------------------------------------------
# Pure-JAX reference (mirrors the PyTorch forward) for a correctness check.
# ---------------------------------------------------------------------------
def _layernorm(x, g, b):
    mu = jnp.mean(x, axis=-1, keepdims=True)
    var = jnp.mean((x - mu) ** 2, axis=-1, keepdims=True)
    return (x - mu) / jnp.sqrt(var + LN_EPS) * g + b


def reference(dec_inp, r_emb, r_w_bias, r_bias, raw):
    hp = jax.lax.Precision.HIGHEST
    Q, B, Dm = dec_inp.shape
    K = r_emb.shape[0]
    w_heads = jnp.einsum('qbd,ed->qbe', dec_inp, raw["W_qkv"], precision=hp)
    q, k, v = jnp.split(w_heads, 3, axis=-1)
    q = q.reshape(Q, B, N_HEAD, D_HEAD)
    k = k.reshape(Q, B, N_HEAD, D_HEAD)
    v = v.reshape(Q, B, N_HEAD, D_HEAD)
    rw_q = q + r_w_bias[None]
    AC = jnp.einsum('ibnd,jbnd->ijbn', rw_q, k, precision=hp)
    B_ = jnp.einsum('ibnd,jnd->ijbn', q, r_emb, precision=hp)
    BDpre = B_ + r_bias[None, :, None, :]
    zp = jnp.zeros((Q, 1, B, N_HEAD), BDpre.dtype)
    padded = jnp.concatenate([zp, BDpre], axis=1)
    BD = padded.reshape(K + 1, Q, B, N_HEAD)[1:].reshape(Q, K, B, N_HEAD)
    score = (AC + BD) * SCALE
    prob = jax.nn.softmax(score, axis=1)
    attn_vec = jnp.einsum('ijbn,jbnd->ibnd', prob, v, precision=hp).reshape(Q, B, HD)
    attn_out = jnp.einsum('qbe,de->qbd', attn_vec, raw["W_o"], precision=hp)
    y1 = _layernorm(dec_inp + attn_out, raw["ln1_g"], raw["ln1_b"])
    h1 = jax.nn.relu(jnp.einsum('qbd,id->qbi', y1, raw["W_ff1"], precision=hp) + raw["b_ff1"])
    h2 = jnp.einsum('qbi,di->qbd', h1, raw["W_ff2"], precision=hp) + raw["b_ff2"]
    return _layernorm(y1 + h2, raw["ln2_g"], raw["ln2_b"])


if __name__ == "__main__":
    keys = jax.random.split(jax.random.PRNGKey(0), 16)

    def rnd(k, shape, s=0.05):
        return s * jax.random.normal(k, shape, jnp.float32)

    # deterministic synthetic parameters (PyTorch weight shapes)
    raw = {
        "W_qkv": rnd(keys[0], (3 * HD, D_MODEL)),      # qkv_net.weight
        "W_o":   rnd(keys[1], (D_MODEL, HD)),          # o_net.weight
        "ln1_g": 1.0 + rnd(keys[2], (D_MODEL,)),
        "ln1_b": rnd(keys[3], (D_MODEL,)),
        "W_ff1": rnd(keys[4], (D_INNER, D_MODEL)),
        "b_ff1": rnd(keys[5], (D_INNER,)),
        "W_ff2": rnd(keys[6], (D_MODEL, D_INNER)),
        "b_ff2": rnd(keys[7], (D_MODEL,)),
        "ln2_g": 1.0 + rnd(keys[8], (D_MODEL,)),
        "ln2_b": rnd(keys[9], (D_MODEL,)),
    }

    # example inputs
    dec_inp = jax.random.normal(keys[10], (QLEN, BSZ, D_MODEL), jnp.float32)
    r_emb = rnd(keys[11], (KLEN, N_HEAD, D_HEAD), 0.1)
    r_w_bias = rnd(keys[12], (N_HEAD, D_HEAD), 0.1)
    r_bias = rnd(keys[13], (KLEN, N_HEAD), 0.1)

    # one-time parameter packing (outside the jitted hot path)
    params = prepare_params(raw, r_emb, r_w_bias, r_bias)

    fwd = jax.jit(rel_learnable_decoder_layer)
    out = fwd(dec_inp, params)
    out = jax.block_until_ready(out)

    ref = reference(dec_inp, r_emb, r_w_bias, r_bias, raw)
    np.testing.assert_allclose(np.asarray(out), np.asarray(ref), rtol=5e-3, atol=5e-3)

    print("KERNEL_OK")
</pallas_src>

<mosaic_0001>
module attributes {stable_mosaic.version = 11 : i64} {
  func.func @_decoder_layer_kernel(%arg0: memref<8x64xf32, #tpu.memory_space<vmem>>, %arg1: memref<32x48xf32, #tpu.memory_space<vmem>>, %arg2: memref<1x16xf32, #tpu.memory_space<vmem>>, %arg3: memref<8x16xf32, #tpu.memory_space<vmem>>, %arg4: memref<8x16xf32, #tpu.memory_space<vmem>>, %arg5: memref<1x64xf32, #tpu.memory_space<vmem>>, %arg6: memref<16x32xf32, #tpu.memory_space<vmem>>, %arg7: memref<1x32xf32, #tpu.memory_space<vmem>>, %arg8: memref<1x32xf32, #tpu.memory_space<vmem>>, %arg9: memref<32x64xf32, #tpu.memory_space<vmem>>, %arg10: memref<1x64xf32, #tpu.memory_space<vmem>>, %arg11: memref<64x32xf32, #tpu.memory_space<vmem>>, %arg12: memref<1x32xf32, #tpu.memory_space<vmem>>, %arg13: memref<1x32xf32, #tpu.memory_space<vmem>>, %arg14: memref<1x32xf32, #tpu.memory_space<vmem>>, %arg15: memref<8x128xf32, #tpu.memory_space<vmem>>) attributes {dimension_semantics = [], scalar_prefetch = 0 : i64, scratch_operands = 0 : i64, tpu.core_type = #tpu.core_type<tc>} {
    %c0 = arith.constant 0 : index
    %c0_0 = arith.constant 0 : index
    %0 = vector.load %arg0[%c0, %c0_0] : memref<8x64xf32, #tpu.memory_space<vmem>>, vector<8x64xf32>
    %1 = vector.extract_strided_slice %0 {offsets = [0, 0], sizes = [8, 32], strides = [1, 1]} : vector<8x64xf32> to vector<8x32xf32>
    %2 = vector.extract_strided_slice %0 {offsets = [0, 32], sizes = [8, 32], strides = [1, 1]} : vector<8x64xf32> to vector<8x32xf32>
    %3 = tpu.concatenate %1, %2 in 0 : vector<8x32xf32>, vector<8x32xf32> -> vector<16x32xf32>
    %c0_1 = arith.constant 0 : index
    %c0_2 = arith.constant 0 : index
    %4 = vector.load %arg1[%c0_1, %c0_2] : memref<32x48xf32, #tpu.memory_space<vmem>>, vector<32x48xf32>
    %cst = arith.constant dense<0.000000e+00> : vector<16x48xf32>
    %5 = tpu.matmul %3, %4, %cst {dimension_numbers = #tpu.dot_dimension_numbers<[1], [0], [0], [1], [0, 0, 1, 1], [], []>} : vector<16x32xf32>, vector<32x48xf32>, vector<16x48xf32> -> vector<16x48xf32>
    %c0_3 = arith.constant 0 : index
    %c0_4 = arith.constant 0 : index
    %6 = vector.load %arg2[%c0_3, %c0_4] : memref<1x16xf32, #tpu.memory_space<vmem>>, vector<1x16xf32>
    %c0_5 = arith.constant 0 : index
    %c0_6 = arith.constant 0 : index
    %7 = vector.load %arg3[%c0_5, %c0_6] : memref<8x16xf32, #tpu.memory_space<vmem>>, vector<8x16xf32>
    %c0_7 = arith.constant 0 : index
    %c0_8 = arith.constant 0 : index
    %8 = vector.load %arg4[%c0_7, %c0_8] : memref<8x16xf32, #tpu.memory_space<vmem>>, vector<8x16xf32>
    %c0_9 = arith.constant 0 : index
    %c0_10 = arith.constant 0 : index
    %9 = vector.load %arg5[%c0_9, %c0_10] : memref<1x64xf32, #tpu.memory_space<vmem>>, vector<1x64xf32>
    %10 = tpu.iota {dimensions = array<i32: 1>} : vector<1x16xi32>
    %c8_i32 = arith.constant 8 : i32
    %11 = vector.broadcast %c8_i32 : i32 to vector<1x16xi32>
    %12 = arith.cmpi slt, %10, %11 : vector<1x16xi32>
    %c8_i32_11 = arith.constant 8 : i32
    %13 = vector.broadcast %c8_i32_11 : i32 to vector<1x16xi32>
    %14 = arith.cmpi sge, %10, %13 : vector<1x16xi32>
    %15 = tpu.iota {dimensions = array<i32: 1>} : vector<1x64xi32>
    %c15_i32 = arith.constant 15 : i32
    %16 = vector.broadcast %c15_i32 : i32 to vector<1x64xi32>
    %17 = arith.andi %15, %16 : vector<1x64xi32>
    %c8_i32_12 = arith.constant 8 : i32
    %18 = vector.broadcast %c8_i32_12 : i32 to vector<1x64xi32>
    %19 = arith.cmpi slt, %17, %18 : vector<1x64xi32>
    %20 = tpu.iota {dimensions = array<i32: 0>} : vector<8x1xi32>
    %21 = vector.extract_strided_slice %5 {offsets = [0, 0], sizes = [16, 16], strides = [1, 1]} : vector<16x48xf32> to vector<16x16xf32>
    %22 = vector.extract_strided_slice %5 {offsets = [0, 16], sizes = [8, 16], strides = [1, 1]} : vector<16x48xf32> to vector<8x16xf32>
    %23 = vector.extract_strided_slice %5 {offsets = [8, 16], sizes = [8, 16], strides = [1, 1]} : vector<16x48xf32> to vector<8x16xf32>
    %24 = vector.extract_strided_slice %5 {offsets = [0, 32], sizes = [8, 16], strides = [1, 1]} : vector<16x48xf32> to vector<8x16xf32>
    %25 = vector.extract_strided_slice %5 {offsets = [8, 32], sizes = [8, 16], strides = [1, 1]} : vector<16x48xf32> to vector<8x16xf32>
    %26 = tpu.concatenate %21, %6 in 0 : vector<16x16xf32>, vector<1x16xf32> -> vector<17x16xf32>
    %cst_13 = arith.constant 0.000000e+00 : f32
    %27 = vector.shape_cast %12 : vector<1x16xi1> to vector<1x16xi1>
    %28 = vector.broadcast %27 : vector<1x16xi1> to vector<8x16xi1>
    %29 = vector.broadcast %cst_13 : f32 to vector<8x16xf32>
    %30 = arith.select %28, %22, %29 : vector<8x16xi1>, vector<8x16xf32>
    %cst_14 = arith.constant 0.000000e+00 : f32
    %31 = vector.shape_cast %14 : vector<1x16xi1> to vector<1x16xi1>
    %32 = vector.broadcast %31 : vector<1x16xi1> to vector<8x16xi1>
    %33 = vector.broadcast %cst_14 : f32 to vector<8x16xf32>
    %34 = arith.select %32, %22, %33 : vector<8x16xi1>, vector<8x16xf32>
    %cst_15 = arith.constant 0.000000e+00 : f32
    %35 = vector.shape_cast %12 : vector<1x16xi1> to vector<1x16xi1>
    %36 = vector.broadcast %35 : vector<1x16xi1> to vector<8x16xi1>
    %37 = vector.broadcast %cst_15 : f32 to vector<8x16xf32>
    %38 = arith.select %36, %23, %37 : vector<8x16xi1>, vector<8x16xf32>
    %cst_16 = arith.constant 0.000000e+00 : f32
    %39 = vector.shape_cast %14 : vector<1x16xi1> to vector<1x16xi1>
    %40 = vector.broadcast %39 : vector<1x16xi1> to vector<8x16xi1>
    %41 = vector.broadcast %cst_16 : f32 to vector<8x16xf32>
    %42 = arith.select %40, %23, %41 : vector<8x16xi1>, vector<8x16xf32>
    %43 = tpu.concatenate %30, %7, %34, %8, %38, %7, %42, %8 in 0 : vector<8x16xf32>, vector<8x16xf32>, vector<8x16xf32>, vector<8x16xf32>, vector<8x16xf32>, vector<8x16xf32>, vector<8x16xf32>, vector<8x16xf32> -> vector<64x16xf32>
    %cst_17 = arith.constant dense<0.000000e+00> : vector<17x64xf32>
    %44 = tpu.matmul %26, %43, %cst_17 {dimension_numbers = #tpu.dot_dimension_numbers<[1], [1], [0], [0], [0, 0, 1, 0], [], []>} : vector<17x16xf32>, vector<64x16xf32>, vector<17x64xf32> -> vector<17x64xf32>
    %45 = vector.extract_strided_slice %44 {offsets = [0, 0], sizes = [8, 32], strides = [1, 1]} : vector<17x64xf32> to vector<8x32xf32>
    %46 = vector.extract_strided_slice %44 {offsets = [8, 32], sizes = [8, 32], strides = [1, 1]} : vector<17x64xf32> to vector<8x32xf32>
    %47 = tpu.concatenate %45, %46 in 1 : vector<8x32xf32>, vector<8x32xf32> -> vector<8x64xf32>
    %48 = vector.extract_strided_slice %44 {offsets = [1, 0], sizes = [8, 32], strides = [1, 1]} : vector<17x64xf32> to vector<8x32xf32>
    %49 = vector.extract_strided_slice %44 {offsets = [9, 32], sizes = [8, 32], strides = [1, 1]} : vector<17x64xf32> to vector<8x32xf32>
    %50 = tpu.concatenate %48, %49 in 1 : vector<8x32xf32>, vector<8x32xf32> -> vector<8x64xf32>
    %51 = vector.extract_strided_slice %44 {offsets = [16, 0], sizes = [1, 64], strides = [1, 1]} : vector<17x64xf32> to vector<1x64xf32>
    %cst_18 = arith.constant 0.000000e+00 : f32
    %52 = vector.broadcast %cst_18 : f32 to vector<1x64xf32>
    %53 = arith.select %19, %51, %52 : vector<1x64xi1>, vector<1x64xf32>
    %54 = vector.broadcast %53 : vector<1x64xf32> to vector<8x64xf32>
    %55 = arith.addf %47, %54 : vector<8x64xf32>
    %56 = vector.broadcast %9 : vector<1x64xf32> to vector<8x64xf32>
    %57 = arith.addf %55, %56 : vector<8x64xf32>
    %58 = vector.broadcast %9 : vector<1x64xf32> to vector<8x64xf32>
    %59 = arith.addf %50, %58 : vector<8x64xf32>
    %c7_i32 = arith.constant 7 : i32
    %60 = vector.broadcast %c7_i32 : i32 to vector<8x1xi32>
    %61 = arith.subi %60, %20 : vector<8x1xi32>
    %c6_i32 = arith.constant 6 : i32
    %62 = vector.broadcast %c6_i32 : i32 to vector<8x1xi32>
    %63 = arith.subi %62, %20 : vector<8x1xi32>
    %64 = vector.extract_strided_slice %57 {offsets = [0, 8], sizes = [8, 56], strides = [1, 1]} : vector<8x64xf32> to vector<8x56xf32>
    %cst_19 = arith.constant 0.000000e+00 : f32
    %65 = vector.broadcast %cst_19 : f32 to vector<8x8xf32>
    %66 = tpu.concatenate %64, %65 in 1 : vector<8x56xf32>, vector<8x8xf32> -> vector<8x64xf32>
    %c4_i32 = arith.constant 4 : i32
    %67 = vector.broadcast %c4_i32 : i32 to vector<8x1xi32>
    %68 = arith.andi %61, %67 : vector<8x1xi32>
    %c0_i32 = arith.constant 0 : i32
    %69 = vector.broadcast %c0_i32 : i32 to vector<8x1xi32>
    %70 = arith.cmpi ne, %68, %69 : vector<8x1xi32>
    %71 = vector.extract_strided_slice %66 {offsets = [0, 4], sizes = [8, 60], strides = [1, 1]} : vector<8x64xf32> to vector<8x60xf32>
    %cst_20 = arith.constant 0.000000e+00 : f32
    %72 = vector.broadcast %cst_20 : f32 to vector<8x4xf32>
    %73 = tpu.concatenate %71, %72 in 1 : vector<8x60xf32>, vector<8x4xf32> -> vector<8x64xf32>
    %74 = vector.shape_cast %70 : vector<8x1xi1> to vector<8x1xi1>
    %75 = vector.broadcast %74 : vector<8x1xi1> to vector<8x64xi1>
    %76 = arith.select %75, %73, %66 : vector<8x64xi1>, vector<8x64xf32>
    %c4_i32_21 = arith.constant 4 : i32
    %77 = vector.broadcast %c4_i32_21 : i32 to vector<8x1xi32>
    %78 = arith.andi %63, %77 : vector<8x1xi32>
    %c0_i32_22 = arith.constant 0 : i32
    %79 = vector.broadcast %c0_i32_22 : i32 to vector<8x1xi32>
    %80 = arith.cmpi ne, %78, %79 : vector<8x1xi32>
    %81 = vector.extract_strided_slice %59 {offsets = [0, 4], sizes = [8, 60], strides = [1, 1]} : vector<8x64xf32> to vector<8x60xf32>
    %cst_23 = arith.constant 0.000000e+00 : f32
    %82 = vector.broadcast %cst_23 : f32 to vector<8x4xf32>
    %83 = tpu.concatenate %81, %82 in 1 : vector<8x60xf32>, vector<8x4xf32> -> vector<8x64xf32>
    %84 = vector.shape_cast %80 : vector<8x1xi1> to vector<8x1xi1>
    %85 = vector.broadcast %84 : vector<8x1xi1> to vector<8x64xi1>
    %86 = arith.select %85, %83, %59 : vector<8x64xi1>, vector<8x64xf32>
    %c2_i32 = arith.constant 2 : i32
    %87 = vector.broadcast %c2_i32 : i32 to vector<8x1xi32>
    %88 = arith.andi %61, %87 : vector<8x1xi32>
    %c0_i32_24 = arith.constant 0 : i32
    %89 = vector.broadcast %c0_i32_24 : i32 to vector<8x1xi32>
    %90 = arith.cmpi ne, %88, %89 : vector<8x1xi32>
    %91 = vector.extract_strided_slice %76 {offsets = [0, 2], sizes = [8, 62], strides = [1, 1]} : vector<8x64xf32> to vector<8x62xf32>
    %cst_25 = arith.constant 0.000000e+00 : f32
    %92 = vector.broadcast %cst_25 : f32 to vector<8x2xf32>
    %93 = tpu.concatenate %91, %92 in 1 : vector<8x62xf32>, vector<8x2xf32> -> vector<8x64xf32>
    %94 = vector.shape_cast %90 : vector<8x1xi1> to vector<8x1xi1>
    %95 = vector.broadcast %94 : vector<8x1xi1> to vector<8x64xi1>
    %96 = arith.select %95, %93, %76 : vector<8x64xi1>, vector<8x64xf32>
    %c2_i32_26 = arith.constant 2 : i32
    %97 = vector.broadcast %c2_i32_26 : i32 to vector<8x1xi32>
    %98 = arith.andi %63, %97 : vector<8x1xi32>
    %c0_i32_27 = arith.constant 0 : i32
    %99 = vector.broadcast %c0_i32_27 : i32 to vector<8x1xi32>
    %100 = arith.cmpi ne, %98, %99 : vector<8x1xi32>
    %101 = vector.extract_strided_slice %86 {offsets = [0, 2], sizes = [8, 62], strides = [1, 1]} : vector<8x64xf32> to vector<8x62xf32>
    %cst_28 = arith.constant 0.000000e+00 : f32
    %102 = vector.broadcast %cst_28 : f32 to vector<8x2xf32>
    %103 = tpu.concatenate %101, %102 in 1 : vector<8x62xf32>, vector<8x2xf32> -> vector<8x64xf32>
    %104 = vector.shape_cast %100 : vector<8x1xi1> to vector<8x1xi1>
    %105 = vector.broadcast %104 : vector<8x1xi1> to vector<8x64xi1>
    %106 = arith.select %105, %103, %86 : vector<8x64xi1>, vector<8x64xf32>
    %c1_i32 = arith.constant 1 : i32
    %107 = vector.broadcast %c1_i32 : i32 to vector<8x1xi32>
    %108 = arith.andi %61, %107 : vector<8x1xi32>
    %c0_i32_29 = arith.constant 0 : i32
    %109 = vector.broadcast %c0_i32_29 : i32 to vector<8x1xi32>
    %110 = arith.cmpi ne, %108, %109 : vector<8x1xi32>
    %111 = vector.extract_strided_slice %96 {offsets = [0, 1], sizes = [8, 63], strides = [1, 1]} : vector<8x64xf32> to vector<8x63xf32>
    %cst_30 = arith.constant 0.000000e+00 : f32
    %112 = vector.broadcast %cst_30 : f32 to vector<8x1xf32>
    %113 = tpu.concatenate %111, %112 in 1 : vector<8x63xf32>, vector<8x1xf32> -> vector<8x64xf32>
    %114 = vector.shape_cast %110 : vector<8x1xi1> to vector<8x1xi1>
    %115 = vector.broadcast %114 : vector<8x1xi1> to vector<8x64xi1>
    %116 = arith.select %115, %113, %96 : vector<8x64xi1>, vector<8x64xf32>
    %c1_i32_31 = arith.constant 1 : i32
    %117 = vector.broadcast %c1_i32_31 : i32 to vector<8x1xi32>
    %118 = arith.andi %63, %117 : vector<8x1xi32>
    %c0_i32_32 = arith.constant 0 : i32
    %119 = vector.broadcast %c0_i32_32 : i32 to vector<8x1xi32>
    %120 = arith.cmpi ne, %118, %119 : vector<8x1xi32>
    %121 = vector.extract_strided_slice %106 {offsets = [0, 1], sizes = [8, 63], strides = [1, 1]} : vector<8x64xf32> to vector<8x63xf32>
    %cst_33 = arith.constant 0.000000e+00 : f32
    %122 = vector.broadcast %cst_33 : f32 to vector<8x1xf32>
    %123 = tpu.concatenate %121, %122 in 1 : vector<8x63xf32>, vector<8x1xf32> -> vector<8x64xf32>
    %124 = vector.shape_cast %120 : vector<8x1xi1> to vector<8x1xi1>
    %125 = vector.broadcast %124 : vector<8x1xi1> to vector<8x64xi1>
    %126 = arith.select %125, %123, %106 : vector<8x64xi1>, vector<8x64xf32>
    %127 = vector.broadcast %17 : vector<1x64xi32> to vector<8x64xi32>
    %128 = vector.broadcast %20 : vector<8x1xi32> to vector<8x64xi32>
    %129 = arith.cmpi sle, %127, %128 : vector<8x64xi32>
    %130 = vector.broadcast %19 : vector<1x64xi1> to vector<8x64xi1>
    %131 = arith.andi %129, %130 : vector<8x64xi1>
    %c2_i32_34 = arith.constant 2 : i32
    %132 = vector.broadcast %c2_i32_34 : i32 to vector<8x1xi32>
    %133 = arith.addi %20, %132 : vector<8x1xi32>
    %134 = vector.broadcast %17 : vector<1x64xi32> to vector<8x64xi32>
    %135 = vector.broadcast %133 : vector<8x1xi32> to vector<8x64xi32>
    %136 = arith.cmpi sge, %134, %135 : vector<8x64xi32>
    %137 = vector.broadcast %19 : vector<1x64xi1> to vector<8x64xi1>
    %138 = arith.andi %136, %137 : vector<8x64xi1>
    %cst_35 = arith.constant 0.000000e+00 : f32
    %139 = vector.broadcast %cst_35 : f32 to vector<8x64xf32>
    %140 = arith.select %131, %116, %139 : vector<8x64xi1>, vector<8x64xf32>
    %141 = arith.addf %57, %140 : vector<8x64xf32>
    %142 = arith.select %138, %126, %139 : vector<8x64xi1>, vector<8x64xf32>
    %143 = arith.addf %141, %142 : vector<8x64xf32>
    %cst_36 = arith.constant 0.353553385 : f32
    %144 = vector.broadcast %cst_36 : f32 to vector<8x64xf32>
    %145 = arith.mulf %143, %144 : vector<8x64xf32>
    %146 = vector.extract_strided_slice %145 {offsets = [0, 0], sizes = [8, 8], strides = [1, 1]} : vector<8x64xf32> to vector<8x8xf32>
    %cst_37 = arith.constant dense<0xFF800000> : vector<8xf32>
    %147 = vector.multi_reduction <maximumf>, %146, %cst_37 [1] : vector<8x8xf32> to vector<8xf32>
    %148 = vector.shape_cast %147 : vector<8xf32> to vector<8x1xf32>
    %149 = vector.broadcast %148 : vector<8x1xf32> to vector<8x8xf32>
    %150 = arith.subf %146, %149 : vector<8x8xf32>
    %151 = math.exp %150 : vector<8x8xf32>
    %cst_38 = arith.constant dense<0.000000e+00> : vector<8xf32>
    %152 = vector.multi_reduction <add>, %151, %cst_38 [1] : vector<8x8xf32> to vector<8xf32>
    %153 = vector.shape_cast %152 : vector<8xf32> to vector<8x1xf32>
    %154 = vector.broadcast %153 : vector<8x1xf32> to vector<8x8xf32>
    %155 = arith.divf %151, %154 : vector<8x8xf32>
    %156 = vector.extract_strided_slice %145 {offsets = [0, 16], sizes = [8, 8], strides = [1, 1]} : vector<8x64xf32> to vector<8x8xf32>
    %cst_39 = arith.constant dense<0xFF800000> : vector<8xf32>
    %157 = vector.multi_reduction <maximumf>, %156, %cst_39 [1] : vector<8x8xf32> to vector<8xf32>
    %158 = vector.shape_cast %157 : vector<8xf32> to vector<8x1xf32>
    %159 = vector.broadcast %158 : vector<8x1xf32> to vector<8x8xf32>
    %160 = arith.subf %156, %159 : vector<8x8xf32>
    %161 = math.exp %160 : vector<8x8xf32>
    %cst_40 = arith.constant dense<0.000000e+00> : vector<8xf32>
    %162 = vector.multi_reduction <add>, %161, %cst_40 [1] : vector<8x8xf32> to vector<8xf32>
    %163 = vector.shape_cast %162 : vector<8xf32> to vector<8x1xf32>
    %164 = vector.broadcast %163 : vector<8x1xf32> to vector<8x8xf32>
    %165 = arith.divf %161, %164 : vector<8x8xf32>
    %166 = tpu.concatenate %155, %165 in 1 : vector<8x8xf32>, vector<8x8xf32> -> vector<8x16xf32>
    %167 = vector.extract_strided_slice %145 {offsets = [0, 32], sizes = [8, 8], strides = [1, 1]} : vector<8x64xf32> to vector<8x8xf32>
    %cst_41 = arith.constant dense<0xFF800000> : vector<8xf32>
    %168 = vector.multi_reduction <maximumf>, %167, %cst_41 [1] : vector<8x8xf32> to vector<8xf32>
    %169 = vector.shape_cast %168 : vector<8xf32> to vector<8x1xf32>
    %170 = vector.broadcast %169 : vector<8x1xf32> to vector<8x8xf32>
    %171 = arith.subf %167, %170 : vector<8x8xf32>
    %172 = math.exp %171 : vector<8x8xf32>
    %cst_42 = arith.constant dense<0.000000e+00> : vector<8xf32>
    %173 = vector.multi_reduction <add>, %172, %cst_42 [1] : vector<8x8xf32> to vector<8xf32>
    %174 = vector.shape_cast %173 : vector<8xf32> to vector<8x1xf32>
    %175 = vector.broadcast %174 : vector<8x1xf32> to vector<8x8xf32>
    %176 = arith.divf %172, %175 : vector<8x8xf32>
    %177 = vector.extract_strided_slice %145 {offsets = [0, 48], sizes = [8, 8], strides = [1, 1]} : vector<8x64xf32> to vector<8x8xf32>
    %cst_43 = arith.constant dense<0xFF800000> : vector<8xf32>
    %178 = vector.multi_reduction <maximumf>, %177, %cst_43 [1] : vector<8x8xf32> to vector<8xf32>
    %179 = vector.shape_cast %178 : vector<8xf32> to vector<8x1xf32>
    %180 = vector.broadcast %179 : vector<8x1xf32> to vector<8x8xf32>
    %181 = arith.subf %177, %180 : vector<8x8xf32>
    %182 = math.exp %181 : vector<8x8xf32>
    %cst_44 = arith.constant dense<0.000000e+00> : vector<8xf32>
    %183 = vector.multi_reduction <add>, %182, %cst_44 [1] : vector<8x8xf32> to vector<8xf32>
    %184 = vector.shape_cast %183 : vector<8xf32> to vector<8x1xf32>
    %185 = vector.broadcast %184 : vector<8x1xf32> to vector<8x8xf32>
    %186 = arith.divf %182, %185 : vector<8x8xf32>
    %187 = tpu.concatenate %176, %186 in 1 : vector<8x8xf32>, vector<8x8xf32> -> vector<8x16xf32>
    %cst_45 = arith.constant 0.000000e+00 : f32
    %188 = vector.broadcast %cst_45 : f32 to vector<8x16xf32>
    %189 = tpu.concatenate %166, %188 in 1 : vector<8x16xf32>, vector<8x16xf32> -> vector<8x32xf32>
    %190 = tpu.concatenate %188, %187 in 1 : vector<8x16xf32>, vector<8x16xf32> -> vector<8x32xf32>
    %191 = tpu.concatenate %189, %190 in 0 : vector<8x32xf32>, vector<8x32xf32> -> vector<16x32xf32>
    %cst_46 = arith.constant 0.000000e+00 : f32
    %192 = vector.shape_cast %12 : vector<1x16xi1> to vector<1x16xi1>
    %193 = vector.broadcast %192 : vector<1x16xi1> to vector<8x16xi1>
    %194 = vector.broadcast %cst_46 : f32 to vector<8x16xf32>
    %195 = arith.select %193, %24, %194 : vector<8x16xi1>, vector<8x16xf32>
    %cst_47 = arith.constant 0.000000e+00 : f32
    %196 = vector.shape_cast %14 : vector<1x16xi1> to vector<1x16xi1>
    %197 = vector.broadcast %196 : vector<1x16xi1> to vector<8x16xi1>
    %198 = vector.broadcast %cst_47 : f32 to vector<8x16xf32>
    %199 = arith.select %197, %24, %198 : vector<8x16xi1>, vector<8x16xf32>
    %cst_48 = arith.constant 0.000000e+00 : f32
    %200 = vector.shape_cast %12 : vector<1x16xi1> to vector<1x16xi1>
    %201 = vector.broadcast %200 : vector<1x16xi1> to vector<8x16xi1>
    %202 = vector.broadcast %cst_48 : f32 to vector<8x16xf32>
    %203 = arith.select %201, %25, %202 : vector<8x16xi1>, vector<8x16xf32>
    %cst_49 = arith.constant 0.000000e+00 : f32
    %204 = vector.shape_cast %14 : vector<1x16xi1> to vector<1x16xi1>
    %205 = vector.broadcast %204 : vector<1x16xi1> to vector<8x16xi1>
    %206 = vector.broadcast %cst_49 : f32 to vector<8x16xf32>
    %207 = arith.select %205, %25, %206 : vector<8x16xi1>, vector<8x16xf32>
    %208 = tpu.concatenate %195, %199, %203, %207 in 0 : vector<8x16xf32>, vector<8x16xf32>, vector<8x16xf32>, vector<8x16xf32> -> vector<32x16xf32>
    %cst_50 = arith.constant dense<0.000000e+00> : vector<16x16xf32>
    %209 = tpu.matmul %191, %208, %cst_50 {dimension_numbers = #tpu.dot_dimension_numbers<[1], [0], [0], [1], [0, 0, 1, 1], [], []>} : vector<16x32xf32>, vector<32x16xf32>, vector<16x16xf32> -> vector<16x16xf32>
    %c0_51 = arith.constant 0 : index
    %c0_52 = arith.constant 0 : index
    %210 = vector.load %arg6[%c0_51, %c0_52] : memref<16x32xf32, #tpu.memory_space<vmem>>, vector<16x32xf32>
    %cst_53 = arith.constant dense<0.000000e+00> : vector<16x32xf32>
    %211 = tpu.matmul %209, %210, %cst_53 {dimension_numbers = #tpu.dot_dimension_numbers<[1], [0], [0], [1], [0, 0, 1, 1], [], []>} : vector<16x16xf32>, vector<16x32xf32>, vector<16x32xf32> -> vector<16x32xf32>
    %212 = arith.addf %3, %211 : vector<16x32xf32>
    %cst_54 = arith.constant dense<0.000000e+00> : vector<16xf32>
    %213 = vector.multi_reduction <add>, %212, %cst_54 [1] : vector<16x32xf32> to vector<16xf32>
    %214 = vector.shape_cast %213 : vector<16xf32> to vector<16x1xf32>
    %cst_55 = arith.constant 3.200000e+01 : f32
    %215 = vector.broadcast %cst_55 : f32 to vector<16x1xf32>
    %216 = arith.divf %214, %215 : vector<16x1xf32>
    %217 = vector.broadcast %216 : vector<16x1xf32> to vector<16x32xf32>
    %218 = arith.subf %212, %217 : vector<16x32xf32>
    %219 = arith.mulf %218, %218 : vector<16x32xf32>
    %cst_56 = arith.constant dense<0.000000e+00> : vector<16xf32>
    %220 = vector.multi_reduction <add>, %219, %cst_56 [1] : vector<16x32xf32> to vector<16xf32>
    %221 = vector.shape_cast %220 : vector<16xf32> to vector<16x1xf32>
    %cst_57 = arith.constant 3.200000e+01 : f32
    %222 = vector.broadcast %cst_57 : f32 to vector<16x1xf32>
    %223 = arith.divf %221, %222 : vector<16x1xf32>
    %224 = vector.broadcast %216 : vector<16x1xf32> to vector<16x32xf32>
    %225 = arith.subf %212, %224 : vector<16x32xf32>
    %cst_58 = arith.constant 9.99999974E-6 : f32
    %226 = vector.broadcast %cst_58 : f32 to vector<16x1xf32>
    %227 = arith.addf %223, %226 : vector<16x1xf32>
    %228 = math.rsqrt %227 : vector<16x1xf32>
    %229 = vector.broadcast %228 : vector<16x1xf32> to vector<16x32xf32>
    %230 = arith.mulf %225, %229 : vector<16x32xf32>
    %c0_59 = arith.constant 0 : index
    %c0_60 = arith.constant 0 : index
    %231 = vector.load %arg7[%c0_59, %c0_60] : memref<1x32xf32, #tpu.memory_space<vmem>>, vector<1x32xf32>
    %232 = vector.broadcast %231 : vector<1x32xf32> to vector<16x32xf32>
    %233 = arith.mulf %230, %232 : vector<16x32xf32>
    %c0_61 = arith.constant 0 : index
    %c0_62 = arith.constant 0 : index
    %234 = vector.load %arg8[%c0_61, %c0_62] : memref<1x32xf32, #tpu.memory_space<vmem>>, vector<1x32xf32>
    %235 = vector.broadcast %234 : vector<1x32xf32> to vector<16x32xf32>
    %236 = arith.addf %233, %235 : vector<16x32xf32>
    %c0_63 = arith.constant 0 : index
    %c0_64 = arith.constant 0 : index
    %237 = vector.load %arg9[%c0_63, %c0_64] : memref<32x64xf32, #tpu.memory_space<vmem>>, vector<32x64xf32>
    %cst_65 = arith.constant dense<0.000000e+00> : vector<16x64xf32>
    %238 = tpu.matmul %236, %237, %cst_65 {dimension_numbers = #tpu.dot_dimension_numbers<[1], [0], [0], [1], [0, 0, 1, 1], [], []>} : vector<16x32xf32>, vector<32x64xf32>, vector<16x64xf32> -> vector<16x64xf32>
    %c0_66 = arith.constant 0 : index
    %c0_67 = arith.constant 0 : index
    %239 = vector.load %arg10[%c0_66, %c0_67] : memref<1x64xf32, #tpu.memory_space<vmem>>, vector<1x64xf32>
    %240 = vector.broadcast %239 : vector<1x64xf32> to vector<16x64xf32>
    %241 = arith.addf %238, %240 : vector<16x64xf32>
    %cst_68 = arith.constant 0.000000e+00 : f32
    %242 = vector.broadcast %cst_68 : f32 to vector<16x64xf32>
    %243 = arith.maximumf %241, %242 : vector<16x64xf32>
    %c0_69 = arith.constant 0 : index
    %c0_70 = arith.constant 0 : index
    %244 = vector.load %arg11[%c0_69, %c0_70] : memref<64x32xf32, #tpu.memory_space<vmem>>, vector<64x32xf32>
    %cst_71 = arith.constant dense<0.000000e+00> : vector<16x32xf32>
    %245 = tpu.matmul %243, %244, %cst_71 {dimension_numbers = #tpu.dot_dimension_numbers<[1], [0], [0], [1], [0, 0, 1, 1], [], []>} : vector<16x64xf32>, vector<64x32xf32>, vector<16x32xf32> -> vector<16x32xf32>
    %c0_72 = arith.constant 0 : index
    %c0_73 = arith.constant 0 : index
    %246 = vector.load %arg12[%c0_72, %c0_73] : memref<1x32xf32, #tpu.memory_space<vmem>>, vector<1x32xf32>
    %247 = vector.broadcast %246 : vector<1x32xf32> to vector<16x32xf32>
    %248 = arith.addf %245, %247 : vector<16x32xf32>
    %249 = arith.addf %236, %248 : vector<16x32xf32>
    %cst_74 = arith.constant dense<0.000000e+00> : vector<16xf32>
    %250 = vector.multi_reduction <add>, %249, %cst_74 [1] : vector<16x32xf32> to vector<16xf32>
    %251 = vector.shape_cast %250 : vector<16xf32> to vector<16x1xf32>
    %cst_75 = arith.constant 3.200000e+01 : f32
    %252 = vector.broadcast %cst_75 : f32 to vector<16x1xf32>
    %253 = arith.divf %251, %252 : vector<16x1xf32>
    %254 = vector.broadcast %253 : vector<16x1xf32> to vector<16x32xf32>
    %255 = arith.subf %249, %254 : vector<16x32xf32>
    %256 = arith.mulf %255, %255 : vector<16x32xf32>
    %cst_76 = arith.constant dense<0.000000e+00> : vector<16xf32>
    %257 = vector.multi_reduction <add>, %256, %cst_76 [1] : vector<16x32xf32> to vector<16xf32>
    %258 = vector.shape_cast %257 : vector<16xf32> to vector<16x1xf32>
    %cst_77 = arith.constant 3.200000e+01 : f32
    %259 = vector.broadcast %cst_77 : f32 to vector<16x1xf32>
    %260 = arith.divf %258, %259 : vector<16x1xf32>
    %261 = vector.broadcast %253 : vector<16x1xf32> to vector<16x32xf32>
    %262 = arith.subf %249, %261 : vector<16x32xf32>
    %cst_78 = arith.constant 9.99999974E-6 : f32
    %263 = vector.broadcast %cst_78 : f32 to vector<16x1xf32>
    %264 = arith.addf %260, %263 : vector<16x1xf32>
    %265 = math.rsqrt %264 : vector<16x1xf32>
    %266 = vector.broadcast %265 : vector<16x1xf32> to vector<16x32xf32>
    %267 = arith.mulf %262, %266 : vector<16x32xf32>
    %c0_79 = arith.constant 0 : index
    %c0_80 = arith.constant 0 : index
    %268 = vector.load %arg13[%c0_79, %c0_80] : memref<1x32xf32, #tpu.memory_space<vmem>>, vector<1x32xf32>
    %269 = vector.broadcast %268 : vector<1x32xf32> to vector<16x32xf32>
    %270 = arith.mulf %267, %269 : vector<16x32xf32>
    %c0_81 = arith.constant 0 : index
    %c0_82 = arith.constant 0 : index
    %271 = vector.load %arg14[%c0_81, %c0_82] : memref<1x32xf32, #tpu.memory_space<vmem>>, vector<1x32xf32>
    %272 = vector.broadcast %271 : vector<1x32xf32> to vector<16x32xf32>
    %273 = arith.addf %270, %272 : vector<16x32xf32>
    %cst_83 = arith.constant 0.000000e+00 : f32
    %274 = vector.broadcast %cst_83 : f32 to vector<8x64xf32>
    %275 = vector.extract_strided_slice %273 {offsets = [0, 0], sizes = [8, 32], strides = [1, 1]} : vector<16x32xf32> to vector<8x32xf32>
    %276 = vector.extract_strided_slice %273 {offsets = [8, 0], sizes = [8, 32], strides = [1, 1]} : vector<16x32xf32> to vector<8x32xf32>
    %277 = tpu.concatenate %275, %276, %274 in 1 : vector<8x32xf32>, vector<8x32xf32>, vector<8x64xf32> -> vector<8x128xf32>
    %c0_84 = arith.constant 0 : index
    %c0_85 = arith.constant 0 : index
    %278 = vector.load %arg15[%c0_84, %c0_85] : memref<8x128xf32, #tpu.memory_space<vmem>>, vector<8x128xf32>
    tpu.vector_store %arg15[%c0_84, %c0_85], %277 {strides = array<i32>} : memref<8x128xf32, #tpu.memory_space<vmem>>, vector<8x128xf32>,
    return
  }
}

</mosaic_0001>

<llo_original>
// kernel: rel_learnable_decoder_layer.1
$region0: #{rel_learnable_decoder_layer.1}
  #allocation0 [shape = 'u32[]', space=smem, size = 0x4, offset = 0x4, fixed_abs, tag = 'smem constant byte address 0x4 - core index']
  #allocation1 [shape = 'u32[144,128]{1,0:T(1,128)}', space=vmem, size = 0x12000, scoped, tag = 'internal scratch']
  %s0 = inlined_call_operand.vmem [shape: f32[8,64], index: 0, kind: input, shape index: {}]
  %s1 = inlined_call_operand.vmem [shape: f32[32,48], index: 1, kind: input, shape index: {}]
  %s2 = inlined_call_operand.vmem [shape: f32[1,16], index: 2, kind: input, shape index: {}]
  %s3 = inlined_call_operand.vmem [shape: f32[8,16], index: 3, kind: input, shape index: {}]
  %s4 = inlined_call_operand.vmem [shape: f32[8,16], index: 4, kind: input, shape index: {}]
  %s5 = inlined_call_operand.vmem [shape: f32[1,64], index: 5, kind: input, shape index: {}]
  %s6 = inlined_call_operand.vmem [shape: f32[16,32], index: 6, kind: input, shape index: {}]
  %s7 = inlined_call_operand.vmem [shape: f32[1,32], index: 7, kind: input, shape index: {}]
  %s8 = inlined_call_operand.vmem [shape: f32[1,32], index: 8, kind: input, shape index: {}]
  %s9 = inlined_call_operand.vmem [shape: f32[32,64], index: 9, kind: input, shape index: {}]
  %s10 = inlined_call_operand.vmem [shape: f32[1,64], index: 10, kind: input, shape index: {}]
  %s11 = inlined_call_operand.vmem [shape: f32[64,32], index: 11, kind: input, shape index: {}]
  %s12 = inlined_call_operand.vmem [shape: f32[1,32], index: 12, kind: input, shape index: {}]
  %s13 = inlined_call_operand.vmem [shape: f32[1,32], index: 13, kind: input, shape index: {}]
  %s14 = inlined_call_operand.vmem [shape: f32[1,32], index: 14, kind: input, shape index: {}]
  %s15 = inlined_call_operand.vmem [shape: f32[8,128], index: 15, kind: output, shape index: {}]
  %s16 = sld [smem:[#allocation0]]
  $region70: #{rel_learnable_decoder_layer.1} parent=0
    _
  %s18 = ssub.s32 1, %s16
  %s19 = scalar_select 0, %s18, %s16
  // Predicated region
  $region2: #{rel_learnable_decoder_layer.1} parent=0 // pred_check
    _
  $region3: #{rel_learnable_decoder_layer.1} parent=0 // pred_check_branch
    %21 = sbr.rel (0) target = $region5
  $region4: #{rel_learnable_decoder_layer.1} parent=0 // pred_region
    _
  $region5: #{rel_learnable_decoder_layer.1} parent=0 // pred_fallthru
    _
  // Predicated region
  $region6: #{rel_learnable_decoder_layer.1} parent=0 // pred_check
    _
  $region7: #{rel_learnable_decoder_layer.1} parent=0 // pred_check_branch
    %23 = sbr.rel (0) target = $region9
  $region8: #{rel_learnable_decoder_layer.1} parent=0 // pred_region
    _
  $region9: #{rel_learnable_decoder_layer.1} parent=0 // pred_fallthru
    _
  // Predicated region
  $region10: #{rel_learnable_decoder_layer.1} parent=0 // pred_check
    _
  $region11: #{rel_learnable_decoder_layer.1} parent=0 // pred_check_branch
    %25 = sbr.rel (0) target = $region13
  $region12: #{rel_learnable_decoder_layer.1} parent=0 // pred_region
    _
  $region13: #{rel_learnable_decoder_layer.1} parent=0 // pred_fallthru
    _
  // Predicated region
  $region14: #{rel_learnable_decoder_layer.1} parent=0 // pred_check
    _
  $region15: #{rel_learnable_decoder_layer.1} parent=0 // pred_check_branch
    %27 = sbr.rel (0) target = $region17
  $region16: #{rel_learnable_decoder_layer.1} parent=0 // pred_region
    _
  $region17: #{rel_learnable_decoder_layer.1} parent=0 // pred_fallthru
    _
  // Predicated region
  $region18: #{rel_learnable_decoder_layer.1} parent=0 // pred_check
    _
  $region19: #{rel_learnable_decoder_layer.1} parent=0 // pred_check_branch
    %29 = sbr.rel (0) target = $region21
  $region20: #{rel_learnable_decoder_layer.1} parent=0 // pred_region
    _
  $region21: #{rel_learnable_decoder_layer.1} parent=0 // pred_fallthru
    _
  // Predicated region
  $region22: #{rel_learnable_decoder_layer.1} parent=0 // pred_check
    _
  $region23: #{rel_learnable_decoder_layer.1} parent=0 // pred_check_branch
    %31 = sbr.rel (0) target = $region25
  $region24: #{rel_learnable_decoder_layer.1} parent=0 // pred_region
    _
  $region25: #{rel_learnable_decoder_layer.1} parent=0 // pred_fallthru
    _
  // Predicated region
  $region26: #{rel_learnable_decoder_layer.1} parent=0 // pred_check
    _
  $region27: #{rel_learnable_decoder_layer.1} parent=0 // pred_check_branch
    %33 = sbr.rel (0) target = $region29
  $region28: #{rel_learnable_decoder_layer.1} parent=0 // pred_region
    _
  $region29: #{rel_learnable_decoder_layer.1} parent=0 // pred_fallthru
    _
  // Predicated region
  $region30: #{rel_learnable_decoder_layer.1} parent=0 // pred_check
    _
  $region31: #{rel_learnable_decoder_layer.1} parent=0 // pred_check_branch
    %35 = sbr.rel (0) target = $region33
  $region32: #{rel_learnable_decoder_layer.1} parent=0 // pred_region
    _
  $region33: #{rel_learnable_decoder_layer.1} parent=0 // pred_fallthru
    _
  // Predicated region
  $region34: #{rel_learnable_decoder_layer.1} parent=0 // pred_check
    _
  $region35: #{rel_learnable_decoder_layer.1} parent=0 // pred_check_branch
    %37 = sbr.rel (0) target = $region37
  $region36: #{rel_learnable_decoder_layer.1} parent=0 // pred_region
    _
  $region37: #{rel_learnable_decoder_layer.1} parent=0 // pred_fallthru
    _
  // Predicated region
  $region38: #{rel_learnable_decoder_layer.1} parent=0 // pred_check
    _
  $region39: #{rel_learnable_decoder_layer.1} parent=0 // pred_check_branch
    %39 = sbr.rel (0) target = $region41
  $region40: #{rel_learnable_decoder_layer.1} parent=0 // pred_region
    _
  $region41: #{rel_learnable_decoder_layer.1} parent=0 // pred_fallthru
    _
  // Predicated region
  $region42: #{rel_learnable_decoder_layer.1} parent=0 // pred_check
    _
  $region43: #{rel_learnable_decoder_layer.1} parent=0 // pred_check_branch
    %41 = sbr.rel (0) target = $region45
  $region44: #{rel_learnable_decoder_layer.1} parent=0 // pred_region
    _
  $region45: #{rel_learnable_decoder_layer.1} parent=0 // pred_fallthru
    _
  // Predicated region
  $region46: #{rel_learnable_decoder_layer.1} parent=0 // pred_check
    _
  $region47: #{rel_learnable_decoder_layer.1} parent=0 // pred_check_branch
    %43 = sbr.rel (0) target = $region49
  $region48: #{rel_learnable_decoder_layer.1} parent=0 // pred_region
    _
  $region49: #{rel_learnable_decoder_layer.1} parent=0 // pred_fallthru
    _
  // Predicated region
  $region50: #{rel_learnable_decoder_layer.1} parent=0 // pred_check
    _
  $region51: #{rel_learnable_decoder_layer.1} parent=0 // pred_check_branch
    %45 = sbr.rel (0) target = $region53
  $region52: #{rel_learnable_decoder_layer.1} parent=0 // pred_region
    _
  $region53: #{rel_learnable_decoder_layer.1} parent=0 // pred_fallthru
    _
  // Predicated region
  $region54: #{rel_learnable_decoder_layer.1} parent=0 // pred_check
    _
  $region55: #{rel_learnable_decoder_layer.1} parent=0 // pred_check_branch
    %47 = sbr.rel (0) target = $region57
  $region56: #{rel_learnable_decoder_layer.1} parent=0 // pred_region
    _
  $region57: #{rel_learnable_decoder_layer.1} parent=0 // pred_fallthru
    _
  // Predicated region
  $region58: #{rel_learnable_decoder_layer.1} parent=0 // pred_check
    _
  $region59: #{rel_learnable_decoder_layer.1} parent=0 // pred_check_branch
    %49 = sbr.rel (0) target = $region61
  $region60: #{rel_learnable_decoder_layer.1} parent=0 // pred_region
    _
  $region61: #{rel_learnable_decoder_layer.1} parent=0 // pred_fallthru
    _
  %v50 = vld [vmem:[%s0] sm:$0xff]
  %52 = vrot.lane.b32.xlu0 %v50, 96
  %v53 = vpop.permute.xlu0 %52
  %v55 = vld [vmem:[%s1] sm:$0xff]
  %v56 = vld [vmem:[%s1 + $0x8] sm:$0xff]
  %v57 = vld [vmem:[%s1 + $0x10] sm:$0xff]
  %v58 = vld [vmem:[%s1 + $0x18] sm:$0xff]
  %vm59 = vcmask 261120
  %v60 = vsel %vm59, %v50, 0
  %v62 = vsel %vm59, %v53, 0
  %64 = vmatprep.subr.mxu0 0.0
  %65 = vmatpush1.msra.mxu0 %v55
  %66 = vmatprep.subr.mxu0 0.0
  %67 = vmatpush1.msra.mxu0 %v56
  %68 = vmatprep.subr.mxu0 0.0
  %69 = vmatpush1.msra.mxu0 %v57
  %70 = vmatprep.subr.mxu0 0.0
  %71 = vmatpush1.msra.mxu0 %v58
  %72 = vmatprep.subr.mxu0 0.0
  %73 = vmatpush1.msra.mxu0 0.0
  %74 = vmatprep.subr.mxu0 0.0
  %75 = vmatpush1.msra.mxu0 0.0
  %76 = vmatprep.subr.mxu0 0.0
  %77 = vmatpush1.msra.mxu0 0.0
  %78 = vmatprep.subr.mxu0 0.0
  %79 = vmatpush1.msra.mxu0 0.0
  %80 = vmatprep.subr.mxu0 0.0
  %81 = vmatpush1.msra.mxu0 0.0
  %82 = vmatprep.subr.mxu0 0.0
  %83 = vmatpush1.msra.mxu0 0.0
  %84 = vmatprep.subr.mxu0 0.0
  %85 = vmatpush1.msra.mxu0 0.0
  %86 = vmatprep.subr.mxu0 0.0
  %87 = vmatpush1.msra.mxu0 0.0
  %88 = vmatprep.subr.mxu0 0.0
  %89 = vmatpush1.msra.mxu0 0.0
  %90 = vmatprep.subr.mxu0 0.0
  %91 = vmatpush1.msra.mxu0 0.0
  %92 = vmatprep.subr.mxu0 0.0
  %93 = vmatpush1.msra.mxu0 0.0
  %94 = vmatprep.subr.mxu0 0.0
  %95 = vmatpush1.msra.mxu0 0.0
  %96 = vmatprep.subr.mxu0 0.0
  %97 = vmatpush1.msra.mxu0 0.0
  %98 = vmatprep.subr.mxu0 0.0
  %99 = vmatpush1.msra.mxu0 0.0
  %100 = vmatprep.subr.mxu0 0.0
  %101 = vmatpush1.msra.mxu0 0.0
  %102 = vmatprep.subr.mxu0 0.0
  %103 = vmatpush1.msra.mxu0 0.0
  %104 = vmatprep.subr.mxu0 0.0
  %105 = vmatpush1.msra.mxu0 0.0
  %106 = vmatprep.subr.mxu0 0.0
  %107 = vmatpush1.msra.mxu0 0.0
  %108 = vmatprep.subr.mxu0 0.0
  %109 = vmatpush1.msra.mxu0 0.0
  %110 = vmatprep.subr.mxu0 0.0
  %111 = vmatpush1.msra.mxu0 0.0
  %112 = vmatprep.subr.mxu0 0.0
  %113 = vmatpush1.msra.mxu0 0.0
  %114 = vmatprep.subr.mxu0 0.0
  %115 = vmatpush1.msra.mxu0 0.0
  %116 = vmatprep.subr.mxu0 0.0
  %117 = vmatpush1.msra.mxu0 0.0
  %118 = vmatprep.subr.mxu0 0.0
  %119 = vmatpush1.msra.mxu0 0.0
  %120 = vmatprep.subr.mxu0 0.0
  %121 = vmatpush1.msra.mxu0 0.0
  %122 = vmatprep.subr.mxu0 0.0
  %123 = vmatpush1.msra.mxu0 0.0
  %124 = vmatprep.subr.mxu0 0.0
  %125 = vmatpush1.msra.mxu0 0.0
  %126 = vmatprep.subr.mxu0 0.0
  %127 = vmatpush1.msra.mxu0 0.0
  %128 = vmatprep.mubr.f32.mxu0 0.0
  %129 = vmatmul.mubr.f32.gmra.mrb[0].mxu0 %v60
  %v130 = vpop.f32.mrb[0].mxu0
  %v131 = vadd.f32 0.0, %v130
  %v132 = vpop.f32.mrb[0].mxu0
  %133 = vmatprep.mubr.f32.mxu0 0.0
  %134 = vmatmul.mubr.f32.gmra.mrb[0].mxu0 %v62
  %v135 = vpop.f32.mrb[0].mxu0
  %v136 = vadd.f32 0.0, %v135
  %v137 = vpop.f32.mrb[0].mxu0
  %138 = vdwg.mxu0
  %v139 = vld [vmem:[%s2] sm:$0x1]
  %v140 = vld [vmem:[%s3] sm:$0xff]
  %v141 = vld [vmem:[%s4] sm:$0xff]
  %v142 = vld [vmem:[%s5] sm:$0x1]
  %v143 = vlaneseq
  %v144 = vand.u32 %v143, 127
  %vm145 = vcmp.lt.s32.totalorder %v144, 8
  %vm146 = vcmp.ge.s32.totalorder %v144, 8
  %v147 = vand.u32 %v144, 15
  %vm148 = vcmp.lt.s32.totalorder %v147, 8
  %v149 = vlaneseq
  %v150 = vshrl.u32 %v149, 7
  %v151 = vsel %vm145, 1, 0
  %vm152 = vcmp.eq.s32.totalorder %v151, 1
  %154 = vrot.lane.b32.xlu0 %v131, 112
  %v155 = vpop.permute.xlu0 %154
  %v157 = vsel %vm152, %v155, 0.0
  %v158 = vsel %vm146, 1, 0
  %vm159 = vcmp.eq.s32.totalorder %v158, 1
  %v160 = vsel %vm159, %v155, 0.0
  %162 = vrot.lane.b32.xlu0 %v136, 112
  %v163 = vpop.permute.xlu0 %162
  %v165 = vsel %vm152, %v163, 0.0
  %v166 = vsel %vm159, %v163, 0.0
  %vm167 = vcmask 130048
  %v168 = vsel %vm167, %v131, 0
  %v170 = vsel %vm167, %v136, 0
  %v173 = vsel %vm167, %v139, 0
  %v176 = vsel %vm167, %v157, 0
  %v179 = vsel %vm167, %v140, 0
  %v182 = vsel %vm167, %v160, 0
  %v185 = vsel %vm167, %v141, 0
  %v188 = vsel %vm167, %v165, 0
  %v191 = vsel %vm167, %v166, 0
  %193 = vmatprep.subr.mxu0 0.0
  %194 = vmatpush1.xpose.msra.mxu0 %v176
  %195 = vmatprep.subr.mxu0 0.0
  %196 = vmatpush1.xpose.msra.mxu0 %v179
  %197 = vmatprep.subr.mxu0 0.0
  %198 = vmatpush1.xpose.msra.mxu0 %v182
  %199 = vmatprep.subr.mxu0 0.0
  %200 = vmatpush1.xpose.msra.mxu0 %v185
  %201 = vmatprep.subr.mxu0 0.0
  %202 = vmatpush1.xpose.msra.mxu0 %v188
  %203 = vmatprep.subr.mxu0 0.0
  %204 = vmatpush1.xpose.msra.mxu0 %v179
  %205 = vmatprep.subr.mxu0 0.0
  %206 = vmatpush1.xpose.msra.mxu0 %v191
  %207 = vmatprep.subr.mxu0 0.0
  %208 = vmatpush1.xpose.msra.mxu0 %v185
  %209 = vmatprep.subr.mxu0 0.0
  %210 = vmatpush1.xpose.msra.mxu0 0.0
  %211 = vmatprep.subr.mxu0 0.0
  %212 = vmatpush1.xpose.msra.mxu0 0.0
  %213 = vmatprep.subr.mxu0 0.0
  %214 = vmatpush1.xpose.msra.mxu0 0.0
  %215 = vmatprep.subr.mxu0 0.0
  %216 = vmatpush1.xpose.msra.mxu0 0.0
  %217 = vmatprep.subr.mxu0 0.0
  %218 = vmatpush1.xpose.msra.mxu0 0.0
  %219 = vmatprep.subr.mxu0 0.0
  %220 = vmatpush1.xpose.msra.mxu0 0.0
  %221 = vmatprep.subr.mxu0 0.0
  %222 = vmatpush1.xpose.msra.mxu0 0.0
  %223 = vmatprep.subr.mxu0 0.0
  %224 = vmatpush1.xpose.msra.mxu0 0.0
  %225 = vmatprep.subr.mxu0 0.0
  %226 = vmatpush1.xpose.msra.mxu0 0.0
  %227 = vmatprep.subr.mxu0 0.0
  %228 = vmatpush1.xpose.msra.mxu0 0.0
  %229 = vmatprep.subr.mxu0 0.0
  %230 = vmatpush1.xpose.msra.mxu0 0.0
  %231 = vmatprep.subr.mxu0 0.0
  %232 = vmatpush1.xpose.msra.mxu0 0.0
  %233 = vmatprep.subr.mxu0 0.0
  %234 = vmatpush1.xpose.msra.mxu0 0.0
  %235 = vmatprep.subr.mxu0 0.0
  %236 = vmatpush1.xpose.msra.mxu0 0.0
  %237 = vmatprep.subr.mxu0 0.0
  %238 = vmatpush1.xpose.msra.mxu0 0.0
  %239 = vmatprep.subr.mxu0 0.0
  %240 = vmatpush1.xpose.msra.mxu0 0.0
  %241 = vmatprep.subr.mxu0 0.0
  %242 = vmatpush1.xpose.msra.mxu0 0.0
  %243 = vmatprep.subr.mxu0 0.0
  %244 = vmatpush1.xpose.msra.mxu0 0.0
  %245 = vmatprep.subr.mxu0 0.0
  %246 = vmatpush1.xpose.msra.mxu0 0.0
  %247 = vmatprep.subr.mxu0 0.0
  %248 = vmatpush1.xpose.msra.mxu0 0.0
  %249 = vmatprep.subr.mxu0 0.0
  %250 = vmatpush1.xpose.msra.mxu0 0.0
  %251 = vmatprep.subr.mxu0 0.0
  %252 = vmatpush1.xpose.msra.mxu0 0.0
  %253 = vmatprep.subr.mxu0 0.0
  %254 = vmatpush1.xpose.msra.mxu0 0.0
  %255 = vmatprep.subr.mxu0 0.0
  %256 = vmatpush1.xpose.msra.mxu0 0.0
  %257 = vmatprep.mubr.f32.mxu0 0.0
  %258 = vmatmul.mubr.f32.gmra.mrb[0].mxu0 %v168
  %v259 = vpop.f32.mrb[0].mxu0
  %v260 = vadd.f32 0.0, %v259
  %v261 = vpop.f32.mrb[0].mxu0
  %262 = vmatprep.mubr.f32.mxu0 0.0
  %263 = vmatmul.mubr.f32.gmra.mrb[0].mxu0 %v170
  %v264 = vpop.f32.mrb[0].mxu0
  %v265 = vadd.f32 0.0, %v264
  %v266 = vpop.f32.mrb[0].mxu0
  %267 = vmatprep.mubr.f32.mxu0 0.0
  %268 = vmatmul.mubr.f32.gmra.mrb[0].mxu0 %v173
  %v269 = vpop.f32.mrb[0].mxu0
  %v270 = vadd.f32 0.0, %v269
  %v271 = vpop.f32.mrb[0].mxu0
  %272 = vdwg.mxu0
  %v273 = vsel %vm59, %v260, %v265
  %v274 = vsel %vm59, %v265, %v270
  %v275 = vsel %vm148, %v270, 0.0
  %v276 = vlaneseq
  %v277 = vshrl.u32 %v276, 7
  %v278 = vsub.s32 0, %v277
  %v279 = vrot.slane %v275, %v278
  %v280 = vadd.f32 %v273, %v279
  %v282 = vlaneseq
  %v283 = vshrl.u32 %v282, 7
  %v284 = vsub.s32 0, %v283
  %v285 = vrot.slane %v142, %v284
  %v287 = vadd.f32 %v280, %v285
  %v288 = vadd.f32 %v273, %v285
  %v289 = vadd.f32 %v274, %v285
  %v290 = vsub.s32 7, %v150
  %v291 = vsub.s32 6, %v150
  %293 = vrot.lane.b32.xlu0 %v287, 120
  %v294 = vpop.permute.xlu0 %293
  %vm296 = vcmask 457728
  %v297 = vsel %vm296, %v294, 0.0
  %v298 = vand.u32 %v290, 4
  %vm299 = vcmp.ne.s32.totalorder %v298, 0
  %301 = vrot.lane.b32.xlu0 %v297, 124
  %v302 = vpop.permute.xlu0 %301
  %vm304 = vcmask 490496
  %v305 = vsel %vm304, %v302, 0.0
  %v306 = vsel %vm299, 1, 0
  %vm307 = vcmp.eq.s32.totalorder %v306, 1
  %v308 = vsel %vm307, %v305, %v297
  %v309 = vand.u32 %v291, 4
  %vm310 = vcmp.ne.s32.totalorder %v309, 0
  %313 = vrot.lane.b32.xlu0 %v288, 124
  %v314 = vpop.permute.xlu0 %313
  %315 = vrot.lane.b32.xlu0 %v289, 124
  %v316 = vpop.permute.xlu0 %315
  %v319 = vsel %vm304, %v314, 0.0
  %v320 = vsel %vm304, %v316, 0.0
  %v321 = vsel %vm310, 1, 0
  %vm322 = vcmp.eq.s32.totalorder %v321, 1
  %vm325 = vcmask 1046528
  %v326 = vrot.slane %v319, 1
  %v327 = vrot.slane %v320, 1
  %v328 = vsel %vm325, %v326, %v327
  %v330 = vrot.slane %v288, 1
  %v331 = vrot.slane %v289, 1
  %v332 = vsel %vm325, %v330, %v331
  %v334 = vsel %vm322, %v328, %v332
  %v335 = vand.u32 %v290, 2
  %vm336 = vcmp.ne.s32.totalorder %v335, 0
  %338 = vrot.lane.b32.xlu0 %v308, 126
  %v339 = vpop.permute.xlu0 %338
  %vm341 = vcmask 506880
  %v342 = vsel %vm341, %v339, 0.0
  %v343 = vsel %vm336, 1, 0
  %vm344 = vcmp.eq.s32.totalorder %v343, 1
  %v345 = vsel %vm344, %v342, %v308
  %v346 = vand.u32 %v291, 2
  %vm347 = vcmp.ne.s32.totalorder %v346, 0
  %349 = vrot.lane.b32.xlu0 %v334, 126
  %v350 = vpop.permute.xlu0 %349
  %v352 = vsel %vm341, %v350, 0.0
  %v353 = vsel %vm347, 1, 0
  %vm354 = vcmp.eq.s32.totalorder %v353, 1
  %v355 = vsel %vm354, %v352, %v334
  %v356 = vand.u32 %v290, 1
  %vm357 = vcmp.ne.s32.totalorder %v356, 0
  %359 = vrot.lane.b32.xlu0 %v345, 127
  %v360 = vpop.permute.xlu0 %359
  %vm362 = vcmask 515072
  %v363 = vsel %vm362, %v360, 0.0
  %v364 = vsel %vm357, 1, 0
  %vm365 = vcmp.eq.s32.totalorder %v364, 1
  %v366 = vsel %vm365, %v363, %v345
  %v367 = vand.u32 %v291, 1
  %vm368 = vcmp.ne.s32.totalorder %v367, 0
  %370 = vrot.lane.b32.xlu0 %v355, 127
  %v371 = vpop.permute.xlu0 %370
  %v373 = vsel %vm362, %v371, 0.0
  %v374 = vsel %vm368, 1, 0
  %vm375 = vcmp.eq.s32.totalorder %v374, 1
  %v376 = vsel %vm375, %v373, %v355
  %vm377 = vcmp.le.s32.totalorder %v147, %v150
  %v378 = vsel %vm148, 1, 0
  %vm379 = vcmp.eq.s32.totalorder %v378, 1
  %vm380 = vmand %vm377, %vm379
  %v381 = vadd.s32 %v150, 2
  %vm382 = vcmp.ge.s32.totalorder %v147, %v381
  %vm383 = vmand %vm382, %vm379
  %v384 = vsel %vm380, %v366, 0.0
  %v385 = vadd.f32 %v287, %v384
  %v386 = vsel %vm383, %v376, 0.0
  %v387 = vadd.f32 %v385, %v386
  %v388 = vmul.f32 %v387, 0.35355338
  %vm389 = vcmask 64512
  %v390 = vsel %vm389, %v388, -inf
  %391 = vmax.xlane.f32.xlu0 %v390
  %v392 = vpop.xlane.xlu0 %391
  %v393 = vsub.f32 %v388, %v392
  %v394 = vmul.f32 %v393, 1.442695
  %v395 = vpow.pop %v394
  %v396 = vsel %vm389, %v395, 0.0
  %397 = vadd.xlane.f32.xlu0 %v396
  %v398 = vpop.xlane.xlu0 %397
  %v399 = vrcp.pop %v398
  %v400 = vmul.f32 %v395, %v399
  %vm401 = vcmask 195712
  %v402 = vsel %vm401, %v388, -inf
  %403 = vmax.xlane.f32.xlu0 %v402
  %v404 = vpop.xlane.xlu0 %403
  %v405 = vsub.f32 %v388, %v404
  %v406 = vmul.f32 %v405, 1.442695
  %v407 = vpow.pop %v406
  %409 = vrot.lane.b32.xlu0 %v407, 112
  %v410 = vpop.permute.xlu0 %409
  %v412 = vsel %vm389, %v410, 0.0
  %413 = vadd.xlane.f32.xlu0 %v412
  %v414 = vpop.xlane.xlu0 %413
  %v415 = vrcp.pop %v414
  %v416 = vmul.f32 %v407, %v415
  %418 = vrot.lane.b32.xlu0 %v416, 120
  %v419 = vpop.permute.xlu0 %418
  %v421 = vsel %vm389, %v400, %v419
  %vm422 = vcmask 326912
  %v423 = vsel %vm422, %v388, -inf
  %424 = vmax.xlane.f32.xlu0 %v423
  %v425 = vpop.xlane.xlu0 %424
  %v426 = vsub.f32 %v388, %v425
  %v427 = vmul.f32 %v426, 1.442695
  %v428 = vpow.pop %v427
  %430 = vrot.lane.b32.xlu0 %v428, 96
  %v431 = vpop.permute.xlu0 %430
  %v433 = vsel %vm389, %v431, 0.0
  %434 = vadd.xlane.f32.xlu0 %v433
  %v435 = vpop.xlane.xlu0 %434
  %v436 = vrcp.pop %v435
  %v437 = vmul.f32 %v428, %v436
  %vm438 = vcmask 458112
  %v439 = vsel %vm438, %v388, -inf
  %440 = vmax.xlane.f32.xlu0 %v439
  %v441 = vpop.xlane.xlu0 %440
  %v442 = vsub.f32 %v388, %v441
  %v443 = vmul.f32 %v442, 1.442695
  %v444 = vpow.pop %v443
  %446 = vrot.lane.b32.xlu0 %v444, 80
  %v447 = vpop.permute.xlu0 %446
  %v449 = vsel %vm389, %v447, 0.0
  %450 = vadd.xlane.f32.xlu0 %v449
  %v451 = vpop.xlane.xlu0 %450
  %v452 = vrcp.pop %v451
  %v453 = vmul.f32 %v444, %v452
  %455 = vrot.lane.b32.xlu0 %v437, 96
  %v456 = vpop.permute.xlu0 %455
  %459 = vrot.lane.b32.xlu0 %v453, 88
  %v460 = vpop.permute.xlu0 %459
  %v462 = vsel %vm389, %v456, %v460
  %v463 = vsel %vm167, %v421, 0.0
  %465 = vrot.lane.b32.xlu0 %v462, 16
  %v466 = vpop.permute.xlu0 %465
  %v468 = vsel %vm167, 0.0, %v466
  %469 = vrot.lane.b32.xlu0 %v131, 96
  %v470 = vpop.permute.xlu0 %469
  %v472 = vsel %vm152, %v470, 0.0
  %v473 = vsel %vm159, %v470, 0.0
  %474 = vrot.lane.b32.xlu0 %v136, 96
  %v475 = vpop.permute.xlu0 %474
  %v477 = vsel %vm152, %v475, 0.0
  %v478 = vsel %vm159, %v475, 0.0
  %v480 = vsel %vm59, %v463, 0
  %v483 = vsel %vm59, %v468, 0
  %485 = vmatprep.subr.mxu0 0.0
  %486 = vmatpush1.msra.mxu0 %v472
  %487 = vmatprep.subr.mxu0 0.0
  %488 = vmatpush1.msra.mxu0 %v473
  %489 = vmatprep.subr.mxu0 0.0
  %490 = vmatpush1.msra.mxu0 %v477
  %491 = vmatprep.subr.mxu0 0.0
  %492 = vmatpush1.msra.mxu0 %v478
  %493 = vmatprep.subr.mxu0 0.0
  %494 = vmatpush1.msra.mxu0 0.0
  %495 = vmatprep.subr.mxu0 0.0
  %496 = vmatpush1.msra.mxu0 0.0
  %497 = vmatprep.subr.mxu0 0.0
  %498 = vmatpush1.msra.mxu0 0.0
  %499 = vmatprep.subr.mxu0 0.0
  %500 = vmatpush1.msra.mxu0 0.0
  %501 = vmatprep.subr.mxu0 0.0
  %502 = vmatpush1.msra.mxu0 0.0
  %503 = vmatprep.subr.mxu0 0.0
  %504 = vmatpush1.msra.mxu0 0.0
  %505 = vmatprep.subr.mxu0 0.0
  %506 = vmatpush1.msra.mxu0 0.0
  %507 = vmatprep.subr.mxu0 0.0
  %508 = vmatpush1.msra.mxu0 0.0
  %509 = vmatprep.subr.mxu0 0.0
  %510 = vmatpush1.msra.mxu0 0.0
  %511 = vmatprep.subr.mxu0 0.0
  %512 = vmatpush1.msra.mxu0 0.0
  %513 = vmatprep.subr.mxu0 0.0
  %514 = vmatpush1.msra.mxu0 0.0
  %515 = vmatprep.subr.mxu0 0.0
  %516 = vmatpush1.msra.mxu0 0.0
  %517 = vmatprep.subr.mxu0 0.0
  %518 = vmatpush1.msra.mxu0 0.0
  %519 = vmatprep.subr.mxu0 0.0
  %520 = vmatpush1.msra.mxu0 0.0
  %521 = vmatprep.subr.mxu0 0.0
  %522 = vmatpush1.msra.mxu0 0.0
  %523 = vmatprep.subr.mxu0 0.0
  %524 = vmatpush1.msra.mxu0 0.0
  %525 = vmatprep.subr.mxu0 0.0
  %526 = vmatpush1.msra.mxu0 0.0
  %527 = vmatprep.subr.mxu0 0.0
  %528 = vmatpush1.msra.mxu0 0.0
  %529 = vmatprep.subr.mxu0 0.0
  %530 = vmatpush1.msra.mxu0 0.0
  %531 = vmatprep.subr.mxu0 0.0
  %532 = vmatpush1.msra.mxu0 0.0
  %533 = vmatprep.subr.mxu0 0.0
  %534 = vmatpush1.msra.mxu0 0.0
  %535 = vmatprep.subr.mxu0 0.0
  %536 = vmatpush1.msra.mxu0 0.0
  %537 = vmatprep.subr.mxu0 0.0
  %538 = vmatpush1.msra.mxu0 0.0
  %539 = vmatprep.subr.mxu0 0.0
  %540 = vmatpush1.msra.mxu0 0.0
  %541 = vmatprep.subr.mxu0 0.0
  %542 = vmatpush1.msra.mxu0 0.0
  %543 = vmatprep.subr.mxu0 0.0
  %544 = vmatpush1.msra.mxu0 0.0
  %545 = vmatprep.subr.mxu0 0.0
  %546 = vmatpush1.msra.mxu0 0.0
  %547 = vmatprep.subr.mxu0 0.0
  %548 = vmatpush1.msra.mxu0 0.0
  %549 = vmatprep.mubr.f32.mxu0 0.0
  %550 = vmatmul.mubr.f32.gmra.mrb[0].mxu0 %v480
  %v551 = vpop.f32.mrb[0].mxu0
  %v552 = vadd.f32 0.0, %v551
  %v553 = vpop.f32.mrb[0].mxu0
  %554 = vmatprep.mubr.f32.mxu0 0.0
  %555 = vmatmul.mubr.f32.gmra.mrb[0].mxu0 %v483
  %v556 = vpop.f32.mrb[0].mxu0
  %v557 = vadd.f32 0.0, %v556
  %v558 = vpop.f32.mrb[0].mxu0
  %559 = vdwg.mxu0
  %v560 = vld [vmem:[%s6] sm:$0xff]
  %v561 = vld [vmem:[%s6 + $0x8] sm:$0xff]
  %v563 = vsel %vm167, %v552, 0
  %v566 = vsel %vm167, %v557, 0
  %568 = vmatprep.subr.mxu0 0.0
  %569 = vmatpush1.msra.mxu0 %v560
  %570 = vmatprep.subr.mxu0 0.0
  %571 = vmatpush1.msra.mxu0 %v561
  %572 = vmatprep.subr.mxu0 0.0
  %573 = vmatpush1.msra.mxu0 0.0
  %574 = vmatprep.subr.mxu0 0.0
  %575 = vmatpush1.msra.mxu0 0.0
  %576 = vmatprep.subr.mxu0 0.0
  %577 = vmatpush1.msra.mxu0 0.0
  %578 = vmatprep.subr.mxu0 0.0
  %579 = vmatpush1.msra.mxu0 0.0
  %580 = vmatprep.subr.mxu0 0.0
  %581 = vmatpush1.msra.mxu0 0.0
  %582 = vmatprep.subr.mxu0 0.0
  %583 = vmatpush1.msra.mxu0 0.0
  %584 = vmatprep.subr.mxu0 0.0
  %585 = vmatpush1.msra.mxu0 0.0
  %586 = vmatprep.subr.mxu0 0.0
  %587 = vmatpush1.msra.mxu0 0.0
  %588 = vmatprep.subr.mxu0 0.0
  %589 = vmatpush1.msra.mxu0 0.0
  %590 = vmatprep.subr.mxu0 0.0
  %591 = vmatpush1.msra.mxu0 0.0
  %592 = vmatprep.subr.mxu0 0.0
  %593 = vmatpush1.msra.mxu0 0.0
  %594 = vmatprep.subr.mxu0 0.0
  %595 = vmatpush1.msra.mxu0 0.0
  %596 = vmatprep.subr.mxu0 0.0
  %597 = vmatpush1.msra.mxu0 0.0
  %598 = vmatprep.subr.mxu0 0.0
  %599 = vmatpush1.msra.mxu0 0.0
  %600 = vmatprep.subr.mxu0 0.0
  %601 = vmatpush1.msra.mxu0 0.0
  %602 = vmatprep.subr.mxu0 0.0
  %603 = vmatpush1.msra.mxu0 0.0
  %604 = vmatprep.subr.mxu0 0.0
  %605 = vmatpush1.msra.mxu0 0.0
  %606 = vmatprep.subr.mxu0 0.0
  %607 = vmatpush1.msra.mxu0 0.0
  %608 = vmatprep.subr.mxu0 0.0
  %609 = vmatpush1.msra.mxu0 0.0
  %610 = vmatprep.subr.mxu0 0.0
  %611 = vmatpush1.msra.mxu0 0.0
  %612 = vmatprep.subr.mxu0 0.0
  %613 = vmatpush1.msra.mxu0 0.0
  %614 = vmatprep.subr.mxu0 0.0
  %615 = vmatpush1.msra.mxu0 0.0
  %616 = vmatprep.subr.mxu0 0.0
  %617 = vmatpush1.msra.mxu0 0.0
  %618 = vmatprep.subr.mxu0 0.0
  %619 = vmatpush1.msra.mxu0 0.0
  %620 = vmatprep.subr.mxu0 0.0
  %621 = vmatpush1.msra.mxu0 0.0
  %622 = vmatprep.subr.mxu0 0.0
  %623 = vmatpush1.msra.mxu0 0.0
  %624 = vmatprep.subr.mxu0 0.0
  %625 = vmatpush1.msra.mxu0 0.0
  %626 = vmatprep.subr.mxu0 0.0
  %627 = vmatpush1.msra.mxu0 0.0
  %628 = vmatprep.subr.mxu0 0.0
  %629 = vmatpush1.msra.mxu0 0.0
  %630 = vmatprep.subr.mxu0 0.0
  %631 = vmatpush1.msra.mxu0 0.0
  %632 = vmatprep.mubr.f32.mxu0 0.0
  %633 = vmatmul.mubr.f32.gmra.mrb[0].mxu0 %v563
  %v634 = vpop.f32.mrb[0].mxu0
  %v635 = vadd.f32 0.0, %v634
  %v636 = vpop.f32.mrb[0].mxu0
  %637 = vmatprep.mubr.f32.mxu0 0.0
  %638 = vmatmul.mubr.f32.gmra.mrb[0].mxu0 %v566
  %v639 = vpop.f32.mrb[0].mxu0
  %v640 = vadd.f32 0.0, %v639
  %v641 = vpop.f32.mrb[0].mxu0
  %642 = vdwg.mxu0
  %v643 = vadd.f32 %v50, %v635
  %v644 = vadd.f32 %v53, %v640
  %v645 = vsel %vm59, %v643, 0.0
  %646 = vadd.xlane.f32.xlu0 %v645
  %v647 = vpop.xlane.xlu0 %646
  %v648 = vsel %vm59, %v644, 0.0
  %649 = vadd.xlane.f32.xlu0 %v648
  %v650 = vpop.xlane.xlu0 %649
  %v651 = vrcp.pop 32.0
  %v652 = vmul.f32 %v647, %v651
  %v653 = vmul.f32 %v650, %v651
  %v654 = vsub.f32 %v643, %v652
  %v655 = vsub.f32 %v644, %v653
  %v656 = vmul.f32 %v654, %v654
  %v657 = vmul.f32 %v655, %v655
  %v658 = vsel %vm59, %v656, 0.0
  %659 = vadd.xlane.f32.xlu0 %v658
  %v660 = vpop.xlane.xlu0 %659
  %v661 = vsel %vm59, %v657, 0.0
  %662 = vadd.xlane.f32.xlu0 %v661
  %v663 = vpop.xlane.xlu0 %662
  %v664 = vmul.f32 %v660, %v651
  %v665 = vmul.f32 %v663, %v651
  %v666 = vadd.f32 %v664, 1e-05
  %v667 = vadd.f32 %v665, 1e-05
  %v668 = vrsqrt.pop %v666
  %v669 = vrsqrt.pop %v667
  %v670 = vmul.f32 %v654, %v668
  %v671 = vmul.f32 %v655, %v669
  %v672 = vld [vmem:[%s7] sm:$0x1]
  %v674 = vlaneseq
  %v675 = vshrl.u32 %v674, 7
  %v676 = vsub.s32 0, %v675
  %v677 = vrot.slane %v672, %v676
  %v679 = vmul.f32 %v670, %v677
  %v680 = vmul.f32 %v671, %v677
  %v681 = vld [vmem:[%s8] sm:$0x1]
  %v683 = vlaneseq
  %v684 = vshrl.u32 %v683, 7
  %v685 = vsub.s32 0, %v684
  %v686 = vrot.slane %v681, %v685
  %v688 = vadd.f32 %v679, %v686
  %v689 = vadd.f32 %v680, %v686
  %v690 = vld [vmem:[%s9] sm:$0xff]
  %v691 = vld [vmem:[%s9 + $0x8] sm:$0xff]
  %v692 = vld [vmem:[%s9 + $0x10] sm:$0xff]
  %v693 = vld [vmem:[%s9 + $0x18] sm:$0xff]
  %v694 = vld [vmem:[%s10] sm:$0x1]
  %v696 = vlaneseq
  %v697 = vshrl.u32 %v696, 7
  %v698 = vsub.s32 0, %v697
  %v699 = vrot.slane %v694, %v698
  %v702 = vsel %vm59, %v688, 0
  %v705 = vsel %vm59, %v689, 0
  %707 = vmatprep.subr.mxu0 0.0
  %708 = vmatpush1.msra.mxu0 %v690
  %709 = vmatprep.subr.mxu0 0.0
  %710 = vmatpush1.msra.mxu0 %v691
  %711 = vmatprep.subr.mxu0 0.0
  %712 = vmatpush1.msra.mxu0 %v692
  %713 = vmatprep.subr.mxu0 0.0
  %714 = vmatpush1.msra.mxu0 %v693
  %715 = vmatprep.subr.mxu0 0.0
  %716 = vmatpush1.msra.mxu0 0.0
  %717 = vmatprep.subr.mxu0 0.0
  %718 = vmatpush1.msra.mxu0 0.0
  %719 = vmatprep.subr.mxu0 0.0
  %720 = vmatpush1.msra.mxu0 0.0
  %721 = vmatprep.subr.mxu0 0.0
  %722 = vmatpush1.msra.mxu0 0.0
  %723 = vmatprep.subr.mxu0 0.0
  %724 = vmatpush1.msra.mxu0 0.0
  %725 = vmatprep.subr.mxu0 0.0
  %726 = vmatpush1.msra.mxu0 0.0
  %727 = vmatprep.subr.mxu0 0.0
  %728 = vmatpush1.msra.mxu0 0.0
  %729 = vmatprep.subr.mxu0 0.0
  %730 = vmatpush1.msra.mxu0 0.0
  %731 = vmatprep.subr.mxu0 0.0
  %732 = vmatpush1.msra.mxu0 0.0
  %733 = vmatprep.subr.mxu0 0.0
  %734 = vmatpush1.msra.mxu0 0.0
  %735 = vmatprep.subr.mxu0 0.0
  %736 = vmatpush1.msra.mxu0 0.0
  %737 = vmatprep.subr.mxu0 0.0
  %738 = vmatpush1.msra.mxu0 0.0
  %739 = vmatprep.subr.mxu0 0.0
  %740 = vmatpush1.msra.mxu0 0.0
  %741 = vmatprep.subr.mxu0 0.0
  %742 = vmatpush1.msra.mxu0 0.0
  %743 = vmatprep.subr.mxu0 0.0
  %744 = vmatpush1.msra.mxu0 0.0
  %745 = vmatprep.subr.mxu0 0.0
  %746 = vmatpush1.msra.mxu0 0.0
  %747 = vmatprep.subr.mxu0 0.0
  %748 = vmatpush1.msra.mxu0 0.0
  %749 = vmatprep.subr.mxu0 0.0
  %750 = vmatpush1.msra.mxu0 0.0
  %751 = vmatprep.subr.mxu0 0.0
  %752 = vmatpush1.msra.mxu0 0.0
  %753 = vmatprep.subr.mxu0 0.0
  %754 = vmatpush1.msra.mxu0 0.0
  %755 = vmatprep.subr.mxu0 0.0
  %756 = vmatpush1.msra.mxu0 0.0
  %757 = vmatprep.subr.mxu0 0.0
  %758 = vmatpush1.msra.mxu0 0.0
  %759 = vmatprep.subr.mxu0 0.0
  %760 = vmatpush1.msra.mxu0 0.0
  %761 = vmatprep.subr.mxu0 0.0
  %762 = vmatpush1.msra.mxu0 0.0
  %763 = vmatprep.subr.mxu0 0.0
  %764 = vmatpush1.msra.mxu0 0.0
  %765 = vmatprep.subr.mxu0 0.0
  %766 = vmatpush1.msra.mxu0 0.0
  %767 = vmatprep.subr.mxu0 0.0
  %768 = vmatpush1.msra.mxu0 0.0
  %769 = vmatprep.subr.mxu0 0.0
  %770 = vmatpush1.msra.mxu0 0.0
  %771 = vmatprep.mubr.f32.mxu0 0.0
  %772 = vmatmul.mubr.f32.gmra.mrb[0].mxu0 %v702
  %v773 = vpop.f32.mrb[0].mxu0
  %v774 = vadd.f32 %v699, %v773
  %v775 = vpop.f32.mrb[0].mxu0
  %776 = vmatprep.mubr.f32.mxu0 0.0
  %777 = vmatmul.mubr.f32.gmra.mrb[0].mxu0 %v705
  %v778 = vpop.f32.mrb[0].mxu0
  %v779 = vadd.f32 %v699, %v778
  %v780 = vpop.f32.mrb[0].mxu0
  %781 = vdwg.mxu0
  %v782 = vmax.f32 %v774, 0.0
  %v783 = vmax.f32 %v779, 0.0
  %v784 = vld [vmem:[%s11] sm:$0xff]
  %v785 = vld [vmem:[%s11 + $0x8] sm:$0xff]
  %v786 = vld [vmem:[%s11 + $0x10] sm:$0xff]
  %v787 = vld [vmem:[%s11 + $0x18] sm:$0xff]
  %v788 = vld [vmem:[%s11 + $0x20] sm:$0xff]
  %v789 = vld [vmem:[%s11 + $0x28] sm:$0xff]
  %v790 = vld [vmem:[%s11 + $0x30] sm:$0xff]
  %v791 = vld [vmem:[%s11 + $0x38] sm:$0xff]
  %v792 = vld [vmem:[%s12] sm:$0x1]
  %v794 = vlaneseq
  %v795 = vshrl.u32 %v794, 7
  %v796 = vsub.s32 0, %v795
  %v797 = vrot.slane %v792, %v796
  %vm799 = vcmask 523264
  %v801 = vsel %vm799, %v782, 0
  %v804 = vsel %vm799, %v783, 0
  %806 = vmatprep.subr.mxu0 0.0
  %807 = vmatpush1.msra.mxu0 %v784
  %808 = vmatprep.subr.mxu0 0.0
  %809 = vmatpush1.msra.mxu0 %v785
  %810 = vmatprep.subr.mxu0 0.0
  %811 = vmatpush1.msra.mxu0 %v786
  %812 = vmatprep.subr.mxu0 0.0
  %813 = vmatpush1.msra.mxu0 %v787
  %814 = vmatprep.subr.mxu0 0.0
  %815 = vmatpush1.msra.mxu0 %v788
  %816 = vmatprep.subr.mxu0 0.0
  %817 = vmatpush1.msra.mxu0 %v789
  %818 = vmatprep.subr.mxu0 0.0
  %819 = vmatpush1.msra.mxu0 %v790
  %820 = vmatprep.subr.mxu0 0.0
  %821 = vmatpush1.msra.mxu0 %v791
  %822 = vmatprep.subr.mxu0 0.0
  %823 = vmatpush1.msra.mxu0 0.0
  %824 = vmatprep.subr.mxu0 0.0
  %825 = vmatpush1.msra.mxu0 0.0
  %826 = vmatprep.subr.mxu0 0.0
  %827 = vmatpush1.msra.mxu0 0.0
  %828 = vmatprep.subr.mxu0 0.0
  %829 = vmatpush1.msra.mxu0 0.0
  %830 = vmatprep.subr.mxu0 0.0
  %831 = vmatpush1.msra.mxu0 0.0
  %832 = vmatprep.subr.mxu0 0.0
  %833 = vmatpush1.msra.mxu0 0.0
  %834 = vmatprep.subr.mxu0 0.0
  %835 = vmatpush1.msra.mxu0 0.0
  %836 = vmatprep.subr.mxu0 0.0
  %837 = vmatpush1.msra.mxu0 0.0
  %838 = vmatprep.subr.mxu0 0.0
  %839 = vmatpush1.msra.mxu0 0.0
  %840 = vmatprep.subr.mxu0 0.0
  %841 = vmatpush1.msra.mxu0 0.0
  %842 = vmatprep.subr.mxu0 0.0
  %843 = vmatpush1.msra.mxu0 0.0
  %844 = vmatprep.subr.mxu0 0.0
  %845 = vmatpush1.msra.mxu0 0.0
  %846 = vmatprep.subr.mxu0 0.0
  %847 = vmatpush1.msra.mxu0 0.0
  %848 = vmatprep.subr.mxu0 0.0
  %849 = vmatpush1.msra.mxu0 0.0
  %850 = vmatprep.subr.mxu0 0.0
  %851 = vmatpush1.msra.mxu0 0.0
  %852 = vmatprep.subr.mxu0 0.0
  %853 = vmatpush1.msra.mxu0 0.0
  %854 = vmatprep.subr.mxu0 0.0
  %855 = vmatpush1.msra.mxu0 0.0
  %856 = vmatprep.subr.mxu0 0.0
  %857 = vmatpush1.msra.mxu0 0.0
  %858 = vmatprep.subr.mxu0 0.0
  %859 = vmatpush1.msra.mxu0 0.0
  %860 = vmatprep.subr.mxu0 0.0
  %861 = vmatpush1.msra.mxu0 0.0
  %862 = vmatprep.subr.mxu0 0.0
  %863 = vmatpush1.msra.mxu0 0.0
  %864 = vmatprep.subr.mxu0 0.0
  %865 = vmatpush1.msra.mxu0 0.0
  %866 = vmatprep.subr.mxu0 0.0
  %867 = vmatpush1.msra.mxu0 0.0
  %868 = vmatprep.subr.mxu0 0.0
  %869 = vmatpush1.msra.mxu0 0.0
  %870 = vmatprep.mubr.f32.mxu0 0.0
  %871 = vmatmul.mubr.f32.gmra.mrb[0].mxu0 %v801
  %v872 = vpop.f32.mrb[0].mxu0
  %v873 = vadd.f32 %v797, %v872
  %v874 = vpop.f32.mrb[0].mxu0
  %875 = vmatprep.mubr.f32.mxu0 0.0
  %876 = vmatmul.mubr.f32.gmra.mrb[0].mxu0 %v804
  %v877 = vpop.f32.mrb[0].mxu0
  %v878 = vadd.f32 %v797, %v877
  %v879 = vpop.f32.mrb[0].mxu0
  %880 = vdwg.mxu0
  %v881 = vadd.f32 %v688, %v873
  %v882 = vadd.f32 %v689, %v878
  %v883 = vsel %vm59, %v881, 0.0
  %884 = vadd.xlane.f32.xlu0 %v883
  %v885 = vpop.xlane.xlu0 %884
  %v886 = vsel %vm59, %v882, 0.0
  %887 = vadd.xlane.f32.xlu0 %v886
  %v888 = vpop.xlane.xlu0 %887
  %v889 = vmul.f32 %v885, %v651
  %v890 = vmul.f32 %v888, %v651
  %v891 = vsub.f32 %v881, %v889
  %v892 = vsub.f32 %v882, %v890
  %v893 = vmul.f32 %v891, %v891
  %v894 = vmul.f32 %v892, %v892
  %v895 = vsel %vm59, %v893, 0.0
  %896 = vadd.xlane.f32.xlu0 %v895
  %v897 = vpop.xlane.xlu0 %896
  %v898 = vsel %vm59, %v894, 0.0
  %899 = vadd.xlane.f32.xlu0 %v898
  %v900 = vpop.xlane.xlu0 %899
  %v901 = vmul.f32 %v897, %v651
  %v902 = vmul.f32 %v900, %v651
  %v903 = vadd.f32 %v901, 1e-05
  %v904 = vadd.f32 %v902, 1e-05
  %v905 = vrsqrt.pop %v903
  %v906 = vrsqrt.pop %v904
  %v907 = vmul.f32 %v891, %v905
  %v908 = vmul.f32 %v892, %v906
  %v909 = vld [vmem:[%s13] sm:$0x1]
  %v911 = vlaneseq
  %v912 = vshrl.u32 %v911, 7
  %v913 = vsub.s32 0, %v912
  %v914 = vrot.slane %v909, %v913
  %v916 = vmul.f32 %v907, %v914
  %v917 = vmul.f32 %v908, %v914
  %v918 = vld [vmem:[%s14] sm:$0x1]
  %v920 = vlaneseq
  %v921 = vshrl.u32 %v920, 7
  %v922 = vsub.s32 0, %v921
  %v923 = vrot.slane %v918, %v922
  %v925 = vadd.f32 %v916, %v923
  %v926 = vadd.f32 %v917, %v923
  %928 = vrot.lane.b32.xlu0 %v926, 32
  %v929 = vpop.permute.xlu0 %928
  %v931 = vsel %vm59, %v925, %v929
  %v932 = vsel %vm799, %v931, 0.0
  %933 = vst [vmem:[%s15] sm:$0xff] %v932
  // Predicated region
  $region62: #{rel_learnable_decoder_layer.1} parent=0 // pred_check
    _
  $region63: #{rel_learnable_decoder_layer.1} parent=0 // pred_check_branch
    %935 = sbr.rel (0) target = $region65
  $region64: #{rel_learnable_decoder_layer.1} parent=0 // pred_region
    _
  $region65: #{rel_learnable_decoder_layer.1} parent=0 // pred_fallthru
    _
  // Predicated region
  $region66: #{rel_learnable_decoder_layer.1} parent=0 // pred_check
    _
  $region67: #{rel_learnable_decoder_layer.1} parent=0 // pred_check_branch
    %937 = sbr.rel (0) target = $region69
  $region68: #{rel_learnable_decoder_layer.1} parent=0 // pred_region
    _
  $region69: #{rel_learnable_decoder_layer.1} parent=0 // pred_fallthru
    _

</llo_original>
